<compile_context>
chip_gen: v7x
topology: tpu7x:2x2x1
jax: 0.10.0
libtpu: 0.0.40
codegen_flags: <defaults>
</compile_context>

<pallas_src>
import jax
import jax.numpy as jnp
from jax.experimental import pallas as pl
from jax.experimental.pallas import tpu as pltpu


# ------------------------------ Pallas kernel -------------------------------

def _m5_fused_kernel(x_ref, w_ref, sh_ref, o_ref,
                     c1, p1, l2, c2, p2, l3, c3, p3, l4, c4):
    """One batch element per grid step.

    x_ref : (L1, K1)  bf16  im2col'd conv1 input (K1 = 80)
    w_ref : (R, 128)  bf16  row-stacked weights [w1|w2|w3|w4|wfc], zero lane pad
    sh_ref: (8, 128)  f32   rows 0..3 = per-channel BN/bias shifts, row 4 = fc
                             bias (padded lanes = -1e30)
    o_ref : (8, 128)  f32   log-softmax row broadcast over 8 sublanes
    """
    L1, K1 = x_ref.shape
    P1, C1 = p1.shape
    L2, C2 = c2.shape
    P2 = p2.shape[0]
    L3, C3 = c3.shape
    P3 = p3.shape[0]
    L4, C4 = c4.shape
    P4 = L4 // 4

    # Static row offsets into the packed weight slab (glue concatenation order).
    r1, r2, r3, r4 = K1, l2.shape[1], l3.shape[1], l4.shape[1]
    o1 = 0
    o2 = o1 + r1
    o3 = o2 + r2
    o4 = o3 + r3
    ofc = o4 + r4

    def conv_bn_relu(lhs, w_off, w_rows, c_out, sh_row, dst):
        # Single MXU contraction (bf16 in, f32 accumulate) + shift + ReLU.
        acc = jnp.dot(lhs, w_ref[w_off:w_off + w_rows, 0:c_out],
                      preferred_element_type=jnp.float32)
        dst[...] = jnp.maximum(acc + sh_ref[sh_row:sh_row + 1, 0:c_out], 0.0)

    def pool4(src, n_win):
        # MaxPool1d(4) via sublane-strided reads from the f32 conv scratch.
        if n_win == 1:
            return jnp.max(src[0:4, :], axis=0, keepdims=True)
        a = src[pl.ds(0, n_win, 4), :]
        b = src[pl.ds(1, n_win, 4), :]
        c = src[pl.ds(2, n_win, 4), :]
        d = src[pl.ds(3, n_win, 4), :]
        return jnp.maximum(jnp.maximum(a, b), jnp.maximum(c, d))

    def build_lhs(dst, src, n_rows, c):
        # K-concatenate the 3 shifted row-windows of the pooled activation.
        for t in range(3):
            dst[:, t * c:(t + 1) * c] = src[pl.ds(t, n_rows), :].astype(dst.dtype)

    # ---- layer 1: conv(K=80, s=16) + BN + ReLU, maxpool(4) ----
    conv_bn_relu(x_ref[...], o1, r1, C1, 0, c1)
    p1[...] = pool4(c1, P1)

    # ---- layer 2 ----
    build_lhs(l2, p1, L2, C1)
    conv_bn_relu(l2[...], o2, r2, C2, 1, c2)
    p2[...] = pool4(c2, P2)

    # ---- layer 3 ----
    build_lhs(l3, p2, L3, C2)
    conv_bn_relu(l3[...], o3, r3, C3, 2, c3)
    p3[...] = pool4(c3, P3)

    # ---- layer 4 ----
    build_lhs(l4, p3, L4, C3)
    conv_bn_relu(l4[...], o4, r4, C4, 3, c4)
    pooled4 = pool4(c4, P4)                                   # (P4, C4)

    # ---- global average pool + Linear + log_softmax ----
    feats = jnp.mean(pooled4, axis=0, keepdims=True).astype(w_ref.dtype)  # (1,C4)
    logits = jnp.dot(feats, w_ref[ofc:ofc + C4, :],
                     preferred_element_type=jnp.float32) + sh_ref[4:5, :]
    m = jnp.max(logits, axis=-1, keepdims=True)
    z = logits - m
    lse = jnp.log(jnp.sum(jnp.exp(z), axis=-1, keepdims=True))
    o_ref[...] = jnp.broadcast_to(z - lse, o_ref.shape)


# ------------------------------ glue / wrapper ------------------------------

def _fold_conv_bn(tap_blocks, b, bn, eps):
    """Fold conv bias + eval-mode BN into a tap-stacked weight + shift.

    tap_blocks: list of (C_out, C_in) weight blocks in tap order.
    Returns (sum_t C_in, C_out) weight and (C_out,) shift.
    """
    gamma, beta, mean, var = bn
    scale = gamma / jnp.sqrt(var + eps)                       # (C_out,)
    wf = jnp.concatenate([jnp.transpose(blk * scale[:, None]) for blk in tap_blocks],
                         axis=0)
    shift = beta + (b - mean) * scale
    return wf.astype(jnp.float32), shift.astype(jnp.float32)


def _pad_lanes(w, n=128):
    return jnp.pad(w, ((0, 0), (0, n - w.shape[1])))


def m5_forward(params, x, eps=1e-5):
    B, c_in, L = x.shape
    assert c_in == 1, "M5 default n_input=1"
    stride = 16
    w1 = params["w1"]
    C1, _, K1 = w1.shape
    C2 = params["w2"].shape[0]
    C3 = params["w3"].shape[0]
    C4 = params["w4"].shape[0]
    n_out = params["wfc"].shape[0]

    # static layer sizes
    L1 = (L - K1) // stride + 1
    P1 = L1 // 4
    L2, P2 = P1 - 2, (P1 - 2) // 4
    L3, P3 = P2 - 2, (P2 - 2) // 4
    L4, P4 = P3 - 2, (P3 - 2) // 4
    assert P4 >= 1, "input too short for 4 conv+pool stages"

    # ---- fold BN (eval) + bias into tap-stacked weights + per-channel shifts
    w1f, sh1 = _fold_conv_bn([w1[:, 0, :]], params["b1"], params["bn1"], eps)
    w2f, sh2 = _fold_conv_bn([params["w2"][:, :, t] for t in range(3)],
                             params["b2"], params["bn2"], eps)
    w3f, sh3 = _fold_conv_bn([params["w3"][:, :, t] for t in range(3)],
                             params["b3"], params["bn3"], eps)
    w4f, sh4 = _fold_conv_bn([params["w4"][:, :, t] for t in range(3)],
                             params["b4"], params["bn4"], eps)
    wfc_t = jnp.transpose(params["wfc"]).astype(jnp.float32)   # (C4, n_out)

    # ---- pack all weights into one bf16 slab (rows multiple of 16) ----------
    w_slab = jnp.concatenate(
        [_pad_lanes(w1f), _pad_lanes(w2f), _pad_lanes(w3f),
         _pad_lanes(w4f), _pad_lanes(wfc_t)], axis=0)
    pad_r = (-w_slab.shape[0]) % 16
    if pad_r:
        w_slab = jnp.pad(w_slab, ((0, pad_r), (0, 0)))
    w_slab = w_slab.astype(jnp.bfloat16)

    # ---- pack all shifts + fc bias into one (8,128) f32 slab ---------------
    sh_slab = jnp.zeros((8, 128), jnp.float32)
    sh_slab = sh_slab.at[0, :C1].set(sh1)
    sh_slab = sh_slab.at[1, :C2].set(sh2)
    sh_slab = sh_slab.at[2, :C3].set(sh3)
    sh_slab = sh_slab.at[3, :C4].set(sh4)
    sh_slab = sh_slab.at[4, :].set(-1e30)          # mask padded logit lanes
    sh_slab = sh_slab.at[4, :n_out].set(params["bfc"].astype(jnp.float32))

    # ---- glue-side im2col for conv1: (B, L1, 80), bf16 ---------------------
    idx = jnp.arange(L1)[:, None] * stride + jnp.arange(K1)[None, :]
    xim = x[:, 0, :].astype(jnp.float32)[:, idx].astype(jnp.bfloat16)

    out = pl.pallas_call(
        _m5_fused_kernel,
        out_shape=jax.ShapeDtypeStruct((B, 8, 128), jnp.float32),
        grid=(B,),
        in_specs=[
            pl.BlockSpec((None, L1, K1), lambda b: (b, 0, 0)),
            pl.BlockSpec(w_slab.shape, lambda b: (0, 0)),
            pl.BlockSpec((8, 128), lambda b: (0, 0)),
        ],
        out_specs=pl.BlockSpec((None, 8, 128), lambda b: (b, 0, 0)),
        scratch_shapes=[
            pltpu.VMEM((L1, C1), jnp.float32),      # conv1 out
            pltpu.VMEM((P1, C1), jnp.float32),      # pool1 out
            pltpu.VMEM((L2, 3 * C1), jnp.bfloat16),  # conv2 K-concat lhs
            pltpu.VMEM((L2, C2), jnp.float32),      # conv2 out
            pltpu.VMEM((P2, C2), jnp.float32),      # pool2 out
            pltpu.VMEM((L3, 3 * C2), jnp.bfloat16),  # conv3 K-concat lhs
            pltpu.VMEM((L3, C3), jnp.float32),      # conv3 out
            pltpu.VMEM((P3, C3), jnp.float32),      # pool3 out
            pltpu.VMEM((L4, 3 * C3), jnp.bfloat16),  # conv4 K-concat lhs
            pltpu.VMEM((L4, C4), jnp.float32),      # conv4 out
        ],
        compiler_params=pltpu.CompilerParams(
            dimension_semantics=("parallel",)),
    )(xim, w_slab, sh_slab)

    return out[:, 0, :n_out][:, None, :]            # (B, 1, n_out)


# ------------------------------ params & checks -----------------------------

def init_params(key, n_input=1, n_output=35, n_channel=32):
    def conv_init(k, c_out, c_in, ksize):
        k1, k2 = jax.random.split(k)
        bound = 1.0 / (c_in * ksize) ** 0.5
        w = jax.random.uniform(k1, (c_out, c_in, ksize), jnp.float32, -bound, bound)
        b = jax.random.uniform(k2, (c_out,), jnp.float32, -bound, bound)
        return w, b

    def bn_init(c):  # (gamma, beta, running_mean, running_var) -- eval-mode defaults
        return (jnp.ones((c,), jnp.float32), jnp.zeros((c,), jnp.float32),
                jnp.zeros((c,), jnp.float32), jnp.ones((c,), jnp.float32))

    ks = jax.random.split(key, 5)
    w1, b1 = conv_init(ks[0], n_channel, n_input, 80)
    w2, b2 = conv_init(ks[1], n_channel, n_channel, 3)
    w3, b3 = conv_init(ks[2], 2 * n_channel, n_channel, 3)
    w4, b4 = conv_init(ks[3], 2 * n_channel, 2 * n_channel, 3)
    kf1, kf2 = jax.random.split(ks[4])
    bound = 1.0 / (2 * n_channel) ** 0.5
    wfc = jax.random.uniform(kf1, (n_output, 2 * n_channel), jnp.float32, -bound, bound)
    bfc = jax.random.uniform(kf2, (n_output,), jnp.float32, -bound, bound)
    return dict(w1=w1, b1=b1, bn1=bn_init(n_channel),
                w2=w2, b2=b2, bn2=bn_init(n_channel),
                w3=w3, b3=b3, bn3=bn_init(2 * n_channel),
                w4=w4, b4=b4, bn4=bn_init(2 * n_channel),
                wfc=wfc, bfc=bfc)


def _ref_forward(params, x, eps=1e-5):
    """Pure-JAX float32 reference of the same forward (eval-mode BN)."""
    def conv(y, w, b, stride):
        y = jax.lax.conv_general_dilated(
            y, w, window_strides=(stride,), padding="VALID",
            dimension_numbers=("NCH", "OIH", "NCH"))
        return y + b[None, :, None]

    def bn_relu(y, bn):
        g, bt, m, v = bn
        y = (y - m[None, :, None]) / jnp.sqrt(v[None, :, None] + eps)
        return jnp.maximum(y * g[None, :, None] + bt[None, :, None], 0.0)

    def pool(y, p=4):
        B, C, L = y.shape
        lo = L // p
        return jnp.max(y[:, :, :lo * p].reshape(B, C, lo, p), axis=-1)

    y = pool(bn_relu(conv(x, params["w1"], params["b1"], 16), params["bn1"]))
    y = pool(bn_relu(conv(y, params["w2"], params["b2"], 1), params["bn2"]))
    y = pool(bn_relu(conv(y, params["w3"], params["b3"], 1), params["bn3"]))
    y = pool(bn_relu(conv(y, params["w4"], params["b4"], 1), params["bn4"]))
    y = jnp.mean(y, axis=-1)                                    # (B, C)
    logits = y @ params["wfc"].T + params["bfc"]
    return jax.nn.log_softmax(logits, axis=-1)[:, None, :]      # (B, 1, n_out)


if __name__ == "__main__":
    key = jax.random.PRNGKey(0)
    k_params, k_x = jax.random.split(key)
    params = init_params(k_params)
    # (batch=2, n_input=1, length=8000): length must survive 4 conv+pool stages.
    x = jax.random.normal(k_x, (2, 1, 8000), jnp.float32)

    out = jax.jit(m5_forward)(params, x)
    out = jax.block_until_ready(out)
    assert out.shape == (2, 1, 35), out.shape
    assert bool(jnp.all(jnp.isfinite(out)))

    ref = _ref_forward(params, x)
    err = float(jnp.max(jnp.abs(out - ref)))
    # bf16 MXU inputs with f32 accumulation: allow a slightly looser tolerance.
    assert jnp.allclose(out, ref, atol=2e-2, rtol=2e-2), err

    print("KERNEL_OK")
</pallas_src>

<mosaic_0001>
module attributes {stable_mosaic.version = 11 : i64} {
  func.func @_m5_fused_kernel(%arg0: i32, %arg1: memref<1x496x80xbf16, #tpu.memory_space<vmem>>, %arg2: memref<528x128xbf16, #tpu.memory_space<vmem>>, %arg3: memref<8x128xf32, #tpu.memory_space<vmem>>, %arg4: memref<1x8x128xf32, #tpu.memory_space<vmem>>, %arg5: memref<496x32xf32, #tpu.memory_space<vmem>>, %arg6: memref<124x32xf32, #tpu.memory_space<vmem>>, %arg7: memref<122x96xbf16, #tpu.memory_space<vmem>>, %arg8: memref<122x32xf32, #tpu.memory_space<vmem>>, %arg9: memref<30x32xf32, #tpu.memory_space<vmem>>, %arg10: memref<28x96xbf16, #tpu.memory_space<vmem>>, %arg11: memref<28x64xf32, #tpu.memory_space<vmem>>, %arg12: memref<7x64xf32, #tpu.memory_space<vmem>>, %arg13: memref<5x192xbf16, #tpu.memory_space<vmem>>, %arg14: memref<5x64xf32, #tpu.memory_space<vmem>>) attributes {dimension_semantics = [#tpu.dimension_semantics<parallel>], iteration_bounds = array<i64: 2>, scalar_prefetch = 0 : i64, scratch_operands = 10 : i64, tpu.core_type = #tpu.core_type<tc>, window_params = [{transform_indices = @transform_0, window_bounds = array<i64: 1, 496, 80>}, {pipeline_mode = #tpu.pipeline_mode<synchronous>, transform_indices = @transform_1, window_bounds = array<i64: 528, 128>}, {pipeline_mode = #tpu.pipeline_mode<synchronous>, transform_indices = @transform_2, window_bounds = array<i64: 8, 128>}, {transform_indices = @transform_3, window_bounds = array<i64: 1, 8, 128>}]} {
    %c0 = arith.constant 0 : index
    %c0_0 = arith.constant 0 : index
    %c0_1 = arith.constant 0 : index
    %0 = vector.load %arg1[%c0, %c0_0, %c0_1] : memref<1x496x80xbf16, #tpu.memory_space<vmem>>, vector<1x496x80xbf16>
    %1 = vector.shape_cast %0 : vector<1x496x80xbf16> to vector<496x80xbf16>
    %c0_2 = arith.constant 0 : index
    %c0_3 = arith.constant 0 : index
    %2 = vector.load %arg2[%c0_2, %c0_3] : memref<528x128xbf16, #tpu.memory_space<vmem>>, vector<80x32xbf16>
    %cst = arith.constant dense<0.000000e+00> : vector<496x32xf32>
    %3 = tpu.matmul %1, %2, %cst {dimension_numbers = #tpu.dot_dimension_numbers<[1], [0], [0], [1], [0, 0, 1, 1], [], []>} : vector<496x80xbf16>, vector<80x32xbf16>, vector<496x32xf32> -> vector<496x32xf32>
    %c0_4 = arith.constant 0 : index
    %c0_5 = arith.constant 0 : index
    %4 = vector.load %arg3[%c0_4, %c0_5] : memref<8x128xf32, #tpu.memory_space<vmem>>, vector<1x32xf32>
    %5 = vector.broadcast %4 : vector<1x32xf32> to vector<496x32xf32>
    %6 = arith.addf %3, %5 : vector<496x32xf32>
    %cst_6 = arith.constant 0.000000e+00 : f32
    %7 = vector.broadcast %cst_6 : f32 to vector<496x32xf32>
    %8 = arith.maximumf %6, %7 : vector<496x32xf32>
    %c0_7 = arith.constant 0 : index
    %c0_8 = arith.constant 0 : index
    %9 = vector.load %arg5[%c0_7, %c0_8] : memref<496x32xf32, #tpu.memory_space<vmem>>, vector<496x32xf32>
    tpu.vector_store %arg5[%c0_7, %c0_8], %8 {strides = array<i32>} : memref<496x32xf32, #tpu.memory_space<vmem>>, vector<496x32xf32>,
    %c0_9 = arith.constant 0 : index
    %c0_10 = arith.constant 0 : index
    %10 = tpu.strided_load %arg5[%c0_9, %c0_10] {strides = array<i32: 4, 1>} : memref<496x32xf32, #tpu.memory_space<vmem>>, vector<124x32xf32>
    %c1 = arith.constant 1 : index
    %c0_11 = arith.constant 0 : index
    %11 = tpu.strided_load %arg5[%c1, %c0_11] {strides = array<i32: 4, 1>} : memref<496x32xf32, #tpu.memory_space<vmem>>, vector<124x32xf32>
    %c2 = arith.constant 2 : index
    %c0_12 = arith.constant 0 : index
    %12 = tpu.strided_load %arg5[%c2, %c0_12] {strides = array<i32: 4, 1>} : memref<496x32xf32, #tpu.memory_space<vmem>>, vector<124x32xf32>
    %c3 = arith.constant 3 : index
    %c0_13 = arith.constant 0 : index
    %13 = tpu.strided_load %arg5[%c3, %c0_13] {strides = array<i32: 4, 1>} : memref<496x32xf32, #tpu.memory_space<vmem>>, vector<124x32xf32>
    %14 = arith.maximumf %10, %11 : vector<124x32xf32>
    %15 = arith.maximumf %12, %13 : vector<124x32xf32>
    %16 = arith.maximumf %14, %15 : vector<124x32xf32>
    %c0_14 = arith.constant 0 : index
    %c0_15 = arith.constant 0 : index
    %17 = vector.load %arg6[%c0_14, %c0_15] : memref<124x32xf32, #tpu.memory_space<vmem>>, vector<124x32xf32>
    tpu.vector_store %arg6[%c0_14, %c0_15], %16 {strides = array<i32>} : memref<124x32xf32, #tpu.memory_space<vmem>>, vector<124x32xf32>,
    %c0_16 = arith.constant 0 : index
    %c0_17 = arith.constant 0 : index
    %18 = vector.load %arg6[%c0_16, %c0_17] : memref<124x32xf32, #tpu.memory_space<vmem>>, vector<122x32xf32>
    %19 = arith.truncf %18 : vector<122x32xf32> to vector<122x32xbf16>
    %c0_18 = arith.constant 0 : index
    %c0_19 = arith.constant 0 : index
    %20 = vector.load %arg7[%c0_18, %c0_19] : memref<122x96xbf16, #tpu.memory_space<vmem>>, vector<122x32xbf16>
    tpu.vector_store %arg7[%c0_18, %c0_19], %19 {strides = array<i32>} : memref<122x96xbf16, #tpu.memory_space<vmem>>, vector<122x32xbf16>,
    %c1_20 = arith.constant 1 : index
    %c0_21 = arith.constant 0 : index
    %21 = vector.load %arg6[%c1_20, %c0_21] : memref<124x32xf32, #tpu.memory_space<vmem>>, vector<122x32xf32>
    %22 = arith.truncf %21 : vector<122x32xf32> to vector<122x32xbf16>
    %c0_22 = arith.constant 0 : index
    %c32 = arith.constant 32 : index
    %23 = vector.load %arg7[%c0_22, %c32] : memref<122x96xbf16, #tpu.memory_space<vmem>>, vector<122x32xbf16>
    tpu.vector_store %arg7[%c0_22, %c32], %22 {strides = array<i32>} : memref<122x96xbf16, #tpu.memory_space<vmem>>, vector<122x32xbf16>,
    %c2_23 = arith.constant 2 : index
    %c0_24 = arith.constant 0 : index
    %24 = vector.load %arg6[%c2_23, %c0_24] : memref<124x32xf32, #tpu.memory_space<vmem>>, vector<122x32xf32>
    %25 = arith.truncf %24 : vector<122x32xf32> to vector<122x32xbf16>
    %c0_25 = arith.constant 0 : index
    %c64 = arith.constant 64 : index
    %26 = vector.load %arg7[%c0_25, %c64] : memref<122x96xbf16, #tpu.memory_space<vmem>>, vector<122x32xbf16>
    tpu.vector_store %arg7[%c0_25, %c64], %25 {strides = array<i32>} : memref<122x96xbf16, #tpu.memory_space<vmem>>, vector<122x32xbf16>,
    %c0_26 = arith.constant 0 : index
    %c0_27 = arith.constant 0 : index
    %27 = vector.load %arg7[%c0_26, %c0_27] : memref<122x96xbf16, #tpu.memory_space<vmem>>, vector<122x96xbf16>
    %c80 = arith.constant 80 : index
    %c0_28 = arith.constant 0 : index
    %28 = vector.load %arg2[%c80, %c0_28] : memref<528x128xbf16, #tpu.memory_space<vmem>>, vector<96x32xbf16>
    %cst_29 = arith.constant dense<0.000000e+00> : vector<122x32xf32>
    %29 = tpu.matmul %27, %28, %cst_29 {dimension_numbers = #tpu.dot_dimension_numbers<[1], [0], [0], [1], [0, 0, 1, 1], [], []>} : vector<122x96xbf16>, vector<96x32xbf16>, vector<122x32xf32> -> vector<122x32xf32>
    %c1_30 = arith.constant 1 : index
    %c0_31 = arith.constant 0 : index
    %30 = vector.load %arg3[%c1_30, %c0_31] : memref<8x128xf32, #tpu.memory_space<vmem>>, vector<1x32xf32>
    %31 = vector.broadcast %30 : vector<1x32xf32> to vector<122x32xf32>
    %32 = arith.addf %29, %31 : vector<122x32xf32>
    %cst_32 = arith.constant 0.000000e+00 : f32
    %33 = vector.broadcast %cst_32 : f32 to vector<122x32xf32>
    %34 = arith.maximumf %32, %33 : vector<122x32xf32>
    %c0_33 = arith.constant 0 : index
    %c0_34 = arith.constant 0 : index
    %35 = vector.load %arg8[%c0_33, %c0_34] : memref<122x32xf32, #tpu.memory_space<vmem>>, vector<122x32xf32>
    tpu.vector_store %arg8[%c0_33, %c0_34], %34 {strides = array<i32>} : memref<122x32xf32, #tpu.memory_space<vmem>>, vector<122x32xf32>,
    %c0_35 = arith.constant 0 : index
    %c0_36 = arith.constant 0 : index
    %36 = tpu.strided_load %arg8[%c0_35, %c0_36] {strides = array<i32: 4, 1>} : memref<122x32xf32, #tpu.memory_space<vmem>>, vector<30x32xf32>
    %c1_37 = arith.constant 1 : index
    %c0_38 = arith.constant 0 : index
    %37 = tpu.strided_load %arg8[%c1_37, %c0_38] {strides = array<i32: 4, 1>} : memref<122x32xf32, #tpu.memory_space<vmem>>, vector<30x32xf32>
    %c2_39 = arith.constant 2 : index
    %c0_40 = arith.constant 0 : index
    %38 = tpu.strided_load %arg8[%c2_39, %c0_40] {strides = array<i32: 4, 1>} : memref<122x32xf32, #tpu.memory_space<vmem>>, vector<30x32xf32>
    %c3_41 = arith.constant 3 : index
    %c0_42 = arith.constant 0 : index
    %39 = tpu.strided_load %arg8[%c3_41, %c0_42] {strides = array<i32: 4, 1>} : memref<122x32xf32, #tpu.memory_space<vmem>>, vector<30x32xf32>
    %40 = arith.maximumf %36, %37 : vector<30x32xf32>
    %41 = arith.maximumf %38, %39 : vector<30x32xf32>
    %42 = arith.maximumf %40, %41 : vector<30x32xf32>
    %c0_43 = arith.constant 0 : index
    %c0_44 = arith.constant 0 : index
    %43 = vector.load %arg9[%c0_43, %c0_44] : memref<30x32xf32, #tpu.memory_space<vmem>>, vector<30x32xf32>
    tpu.vector_store %arg9[%c0_43, %c0_44], %42 {strides = array<i32>} : memref<30x32xf32, #tpu.memory_space<vmem>>, vector<30x32xf32>,
    %c0_45 = arith.constant 0 : index
    %c0_46 = arith.constant 0 : index
    %44 = vector.load %arg9[%c0_45, %c0_46] : memref<30x32xf32, #tpu.memory_space<vmem>>, vector<28x32xf32>
    %45 = arith.truncf %44 : vector<28x32xf32> to vector<28x32xbf16>
    %c0_47 = arith.constant 0 : index
    %c0_48 = arith.constant 0 : index
    %46 = vector.load %arg10[%c0_47, %c0_48] : memref<28x96xbf16, #tpu.memory_space<vmem>>, vector<28x32xbf16>
    tpu.vector_store %arg10[%c0_47, %c0_48], %45 {strides = array<i32>} : memref<28x96xbf16, #tpu.memory_space<vmem>>, vector<28x32xbf16>,
    %c1_49 = arith.constant 1 : index
    %c0_50 = arith.constant 0 : index
    %47 = vector.load %arg9[%c1_49, %c0_50] : memref<30x32xf32, #tpu.memory_space<vmem>>, vector<28x32xf32>
    %48 = arith.truncf %47 : vector<28x32xf32> to vector<28x32xbf16>
    %c0_51 = arith.constant 0 : index
    %c32_52 = arith.constant 32 : index
    %49 = vector.load %arg10[%c0_51, %c32_52] : memref<28x96xbf16, #tpu.memory_space<vmem>>, vector<28x32xbf16>
    tpu.vector_store %arg10[%c0_51, %c32_52], %48 {strides = array<i32>} : memref<28x96xbf16, #tpu.memory_space<vmem>>, vector<28x32xbf16>,
    %c2_53 = arith.constant 2 : index
    %c0_54 = arith.constant 0 : index
    %50 = vector.load %arg9[%c2_53, %c0_54] : memref<30x32xf32, #tpu.memory_space<vmem>>, vector<28x32xf32>
    %51 = arith.truncf %50 : vector<28x32xf32> to vector<28x32xbf16>
    %c0_55 = arith.constant 0 : index
    %c64_56 = arith.constant 64 : index
    %52 = vector.load %arg10[%c0_55, %c64_56] : memref<28x96xbf16, #tpu.memory_space<vmem>>, vector<28x32xbf16>
    tpu.vector_store %arg10[%c0_55, %c64_56], %51 {strides = array<i32>} : memref<28x96xbf16, #tpu.memory_space<vmem>>, vector<28x32xbf16>,
    %c0_57 = arith.constant 0 : index
    %c0_58 = arith.constant 0 : index
    %53 = vector.load %arg10[%c0_57, %c0_58] : memref<28x96xbf16, #tpu.memory_space<vmem>>, vector<28x96xbf16>
    %c176 = arith.constant 176 : index
    %c0_59 = arith.constant 0 : index
    %54 = vector.load %arg2[%c176, %c0_59] : memref<528x128xbf16, #tpu.memory_space<vmem>>, vector<96x64xbf16>
    %cst_60 = arith.constant dense<0.000000e+00> : vector<28x64xf32>
    %55 = tpu.matmul %53, %54, %cst_60 {dimension_numbers = #tpu.dot_dimension_numbers<[1], [0], [0], [1], [0, 0, 1, 1], [], []>} : vector<28x96xbf16>, vector<96x64xbf16>, vector<28x64xf32> -> vector<28x64xf32>
    %c2_61 = arith.constant 2 : index
    %c0_62 = arith.constant 0 : index
    %56 = vector.load %arg3[%c2_61, %c0_62] : memref<8x128xf32, #tpu.memory_space<vmem>>, vector<1x64xf32>
    %57 = vector.broadcast %56 : vector<1x64xf32> to vector<28x64xf32>
    %58 = arith.addf %55, %57 : vector<28x64xf32>
    %cst_63 = arith.constant 0.000000e+00 : f32
    %59 = vector.broadcast %cst_63 : f32 to vector<28x64xf32>
    %60 = arith.maximumf %58, %59 : vector<28x64xf32>
    %c0_64 = arith.constant 0 : index
    %c0_65 = arith.constant 0 : index
    %61 = vector.load %arg11[%c0_64, %c0_65] : memref<28x64xf32, #tpu.memory_space<vmem>>, vector<28x64xf32>
    tpu.vector_store %arg11[%c0_64, %c0_65], %60 {strides = array<i32>} : memref<28x64xf32, #tpu.memory_space<vmem>>, vector<28x64xf32>,
    %c0_66 = arith.constant 0 : index
    %c0_67 = arith.constant 0 : index
    %62 = tpu.strided_load %arg11[%c0_66, %c0_67] {strides = array<i32: 4, 1>} : memref<28x64xf32, #tpu.memory_space<vmem>>, vector<7x64xf32>
    %c1_68 = arith.constant 1 : index
    %c0_69 = arith.constant 0 : index
    %63 = tpu.strided_load %arg11[%c1_68, %c0_69] {strides = array<i32: 4, 1>} : memref<28x64xf32, #tpu.memory_space<vmem>>, vector<7x64xf32>
    %c2_70 = arith.constant 2 : index
    %c0_71 = arith.constant 0 : index
    %64 = tpu.strided_load %arg11[%c2_70, %c0_71] {strides = array<i32: 4, 1>} : memref<28x64xf32, #tpu.memory_space<vmem>>, vector<7x64xf32>
    %c3_72 = arith.constant 3 : index
    %c0_73 = arith.constant 0 : index
    %65 = tpu.strided_load %arg11[%c3_72, %c0_73] {strides = array<i32: 4, 1>} : memref<28x64xf32, #tpu.memory_space<vmem>>, vector<7x64xf32>
    %66 = arith.maximumf %62, %63 : vector<7x64xf32>
    %67 = arith.maximumf %64, %65 : vector<7x64xf32>
    %68 = arith.maximumf %66, %67 : vector<7x64xf32>
    %c0_74 = arith.constant 0 : index
    %c0_75 = arith.constant 0 : index
    %69 = vector.load %arg12[%c0_74, %c0_75] : memref<7x64xf32, #tpu.memory_space<vmem>>, vector<7x64xf32>
    tpu.vector_store %arg12[%c0_74, %c0_75], %68 {strides = array<i32>} : memref<7x64xf32, #tpu.memory_space<vmem>>, vector<7x64xf32>,
    %c0_76 = arith.constant 0 : index
    %c0_77 = arith.constant 0 : index
    %70 = vector.load %arg12[%c0_76, %c0_77] : memref<7x64xf32, #tpu.memory_space<vmem>>, vector<5x64xf32>
    %71 = arith.truncf %70 : vector<5x64xf32> to vector<5x64xbf16>
    %c0_78 = arith.constant 0 : index
    %c0_79 = arith.constant 0 : index
    %72 = vector.load %arg13[%c0_78, %c0_79] : memref<5x192xbf16, #tpu.memory_space<vmem>>, vector<5x64xbf16>
    tpu.vector_store %arg13[%c0_78, %c0_79], %71 {strides = array<i32>} : memref<5x192xbf16, #tpu.memory_space<vmem>>, vector<5x64xbf16>,
    %c1_80 = arith.constant 1 : index
    %c0_81 = arith.constant 0 : index
    %73 = vector.load %arg12[%c1_80, %c0_81] : memref<7x64xf32, #tpu.memory_space<vmem>>, vector<5x64xf32>
    %74 = arith.truncf %73 : vector<5x64xf32> to vector<5x64xbf16>
    %c0_82 = arith.constant 0 : index
    %c64_83 = arith.constant 64 : index
    %75 = vector.load %arg13[%c0_82, %c64_83] : memref<5x192xbf16, #tpu.memory_space<vmem>>, vector<5x64xbf16>
    tpu.vector_store %arg13[%c0_82, %c64_83], %74 {strides = array<i32>} : memref<5x192xbf16, #tpu.memory_space<vmem>>, vector<5x64xbf16>,
    %c2_84 = arith.constant 2 : index
    %c0_85 = arith.constant 0 : index
    %76 = vector.load %arg12[%c2_84, %c0_85] : memref<7x64xf32, #tpu.memory_space<vmem>>, vector<5x64xf32>
    %77 = arith.truncf %76 : vector<5x64xf32> to vector<5x64xbf16>
    %c0_86 = arith.constant 0 : index
    %c128 = arith.constant 128 : index
    %78 = vector.load %arg13[%c0_86, %c128] : memref<5x192xbf16, #tpu.memory_space<vmem>>, vector<5x64xbf16>
    tpu.vector_store %arg13[%c0_86, %c128], %77 {strides = array<i32>} : memref<5x192xbf16, #tpu.memory_space<vmem>>, vector<5x64xbf16>,
    %c0_87 = arith.constant 0 : index
    %c0_88 = arith.constant 0 : index
    %79 = vector.load %arg13[%c0_87, %c0_88] : memref<5x192xbf16, #tpu.memory_space<vmem>>, vector<5x192xbf16>
    %c272 = arith.constant 272 : index
    %c0_89 = arith.constant 0 : index
    %80 = vector.load %arg2[%c272, %c0_89] : memref<528x128xbf16, #tpu.memory_space<vmem>>, vector<192x64xbf16>
    %cst_90 = arith.constant dense<0.000000e+00> : vector<5x64xf32>
    %81 = tpu.matmul %79, %80, %cst_90 {dimension_numbers = #tpu.dot_dimension_numbers<[1], [0], [0], [1], [0, 0, 1, 1], [], []>} : vector<5x192xbf16>, vector<192x64xbf16>, vector<5x64xf32> -> vector<5x64xf32>
    %c3_91 = arith.constant 3 : index
    %c0_92 = arith.constant 0 : index
    %82 = vector.load %arg3[%c3_91, %c0_92] : memref<8x128xf32, #tpu.memory_space<vmem>>, vector<1x64xf32>
    %83 = vector.broadcast %82 : vector<1x64xf32> to vector<5x64xf32>
    %84 = arith.addf %81, %83 : vector<5x64xf32>
    %cst_93 = arith.constant 0.000000e+00 : f32
    %85 = vector.broadcast %cst_93 : f32 to vector<5x64xf32>
    %86 = arith.maximumf %84, %85 : vector<5x64xf32>
    %c0_94 = arith.constant 0 : index
    %c0_95 = arith.constant 0 : index
    %87 = vector.load %arg14[%c0_94, %c0_95] : memref<5x64xf32, #tpu.memory_space<vmem>>, vector<5x64xf32>
    tpu.vector_store %arg14[%c0_94, %c0_95], %86 {strides = array<i32>} : memref<5x64xf32, #tpu.memory_space<vmem>>, vector<5x64xf32>,
    %c0_96 = arith.constant 0 : index
    %c0_97 = arith.constant 0 : index
    %88 = vector.load %arg14[%c0_96, %c0_97] : memref<5x64xf32, #tpu.memory_space<vmem>>, vector<4x64xf32>
    %cst_98 = arith.constant dense<0xFF800000> : vector<64xf32>
    %89 = vector.multi_reduction <maximumf>, %88, %cst_98 [0] : vector<4x64xf32> to vector<64xf32>
    %90 = vector.shape_cast %89 : vector<64xf32> to vector<1x64xf32>
    %cst_99 = arith.constant dense<0.000000e+00> : vector<64xf32>
    %91 = vector.multi_reduction <add>, %90, %cst_99 [0] : vector<1x64xf32> to vector<64xf32>
    %92 = vector.shape_cast %91 : vector<64xf32> to vector<1x64xf32>
    %cst_100 = arith.constant 1.000000e+00 : f32
    %93 = vector.broadcast %cst_100 : f32 to vector<1x64xf32>
    %94 = arith.divf %92, %93 : vector<1x64xf32>
    %95 = arith.truncf %94 : vector<1x64xf32> to vector<1x64xbf16>
    %c464 = arith.constant 464 : index
    %c0_101 = arith.constant 0 : index
    %96 = vector.load %arg2[%c464, %c0_101] : memref<528x128xbf16, #tpu.memory_space<vmem>>, vector<64x128xbf16>
    %cst_102 = arith.constant dense<0.000000e+00> : vector<1x128xf32>
    %97 = tpu.matmul %95, %96, %cst_102 {dimension_numbers = #tpu.dot_dimension_numbers<[1], [0], [0], [1], [0, 0, 1, 1], [], []>} : vector<1x64xbf16>, vector<64x128xbf16>, vector<1x128xf32> -> vector<1x128xf32>
    %c4 = arith.constant 4 : index
    %c0_103 = arith.constant 0 : index
    %98 = vector.load %arg3[%c4, %c0_103] : memref<8x128xf32, #tpu.memory_space<vmem>>, vector<1x128xf32>
    %99 = arith.addf %97, %98 : vector<1x128xf32>
    %cst_104 = arith.constant dense<0xFF800000> : vector<1xf32>
    %100 = vector.multi_reduction <maximumf>, %99, %cst_104 [1] : vector<1x128xf32> to vector<1xf32>
    %101 = vector.shape_cast %100 : vector<1xf32> to vector<1x1xf32>
    %102 = vector.broadcast %101 : vector<1x1xf32> to vector<1x128xf32>
    %103 = arith.subf %99, %102 : vector<1x128xf32>
    %104 = math.exp %103 : vector<1x128xf32>
    %cst_105 = arith.constant dense<0.000000e+00> : vector<1xf32>
    %105 = vector.multi_reduction <add>, %104, %cst_105 [1] : vector<1x128xf32> to vector<1xf32>
    %106 = vector.shape_cast %105 : vector<1xf32> to vector<1x1xf32>
    %107 = math.log %106 : vector<1x1xf32>
    %108 = vector.broadcast %107 : vector<1x1xf32> to vector<1x128xf32>
    %109 = arith.subf %103, %108 : vector<1x128xf32>
    %110 = vector.shape_cast %109 : vector<1x128xf32> to vector<1x128xf32>
    %111 = vector.broadcast %110 : vector<1x128xf32> to vector<8x128xf32>
    %c0_106 = arith.constant 0 : index
    %c0_107 = arith.constant 0 : index
    %c0_108 = arith.constant 0 : index
    %112 = vector.load %arg4[%c0_106, %c0_107, %c0_108] : memref<1x8x128xf32, #tpu.memory_space<vmem>>, vector<1x8x128xf32>
    %113 = vector.shape_cast %112 : vector<1x8x128xf32> to vector<8x128xf32>
    %114 = vector.shape_cast %111 : vector<8x128xf32> to vector<1x8x128xf32>
    tpu.vector_store %arg4[%c0_106, %c0_107, %c0_108], %114 {strides = array<i32>} : memref<1x8x128xf32, #tpu.memory_space<vmem>>, vector<1x8x128xf32>,
    return
  }
  func.func @transform_0(%arg0: i32) -> (i32, i32, i32) {
    %c0_i32 = arith.constant 0 : i32
    %c0_i32_0 = arith.constant 0 : i32
    %c0_i32_1 = arith.constant 0 : i32
    return %arg0, %c0_i32, %c0_i32_0 : i32, i32, i32
  }
  func.func @transform_1(%arg0: i32) -> (i32, i32) {
    %c0_i32 = arith.constant 0 : i32
    %c0_i32_0 = arith.constant 0 : i32
    %c0_i32_1 = arith.constant 0 : i32
    return %c0_i32, %c0_i32_0 : i32, i32
  }
  func.func @transform_2(%arg0: i32) -> (i32, i32) {
    %c0_i32 = arith.constant 0 : i32
    %c0_i32_0 = arith.constant 0 : i32
    %c0_i32_1 = arith.constant 0 : i32
    return %c0_i32, %c0_i32_0 : i32, i32
  }
  func.func @transform_3(%arg0: i32) -> (i32, i32, i32) {
    %c0_i32 = arith.constant 0 : i32
    %c0_i32_0 = arith.constant 0 : i32
    %c0_i32_1 = arith.constant 0 : i32
    return %arg0, %c0_i32, %c0_i32_0 : i32, i32, i32
  }
}

</mosaic_0001>

<llo_original>
// kernel: m5_forward.1
$region0: #{m5_forward.1}
  #allocation0 [shape = 'u32[]', space=smem, size = 0x4, offset = 0x4, fixed_abs, tag = 'smem constant byte address 0x4 - core index']
  #allocation1 [shape = 'u32[144,128]{1,0:T(1,128)}', space=vmem, size = 0x12000, scoped, tag = 'internal scratch']
  #allocation2 [shape = 'f32[496,32]{1,0:T(8,128)}', space=vmem, size = 0x3e000, scoped, tag = 'scratch operand']
  #allocation3 [shape = 'f32[124,32]{1,0:T(8,128)}', space=vmem, size = 0x10000, scoped, tag = 'scratch operand']
  #allocation4 [shape = 'bf16[122,96]{1,0:T(8,128)(2,1)}', space=vmem, size = 0x8000, scoped, tag = 'scratch operand']
  #allocation5 [shape = 'f32[122,32]{1,0:T(8,128)}', space=vmem, size = 0x10000, scoped, tag = 'scratch operand']
  #allocation6 [shape = 'f32[30,32]{1,0:T(8,128)}', space=vmem, size = 0x4000, scoped, tag = 'scratch operand']
  #allocation7 [shape = 'bf16[28,96]{1,0:T(8,128)(2,1)}', space=vmem, size = 0x2000, scoped, tag = 'scratch operand']
  #allocation8 [shape = 'f32[28,64]{1,0:T(8,128)}', space=vmem, size = 0x4000, scoped, tag = 'scratch operand']
  #allocation9 [shape = 'f32[7,64]{1,0:T(8,128)}', space=vmem, size = 0x1000, scoped, tag = 'scratch operand']
  #allocation10 [shape = 'bf16[5,192]{1,0:T(8,128)(2,1)}', space=vmem, size = 0x1000, scoped, tag = 'scratch operand']
  #allocation11 [shape = 'f32[5,64]{1,0:T(8,128)}', space=vmem, size = 0x1000, scoped, tag = 'scratch operand']
  %s0 = inlined_call_operand.vmem [shape: bf16[2,496,80], index: 0, kind: input, shape index: {}]
  %s1 = inlined_call_operand.vmem [shape: bf16[528,128], index: 1, kind: input, shape index: {}]
  %s2 = inlined_call_operand.vmem [shape: f32[8,128], index: 2, kind: input, shape index: {}]
  %s3 = inlined_call_operand.vmem [shape: f32[2,8,128], index: 3, kind: output, shape index: {}]
  %s4 = sld [smem:[#allocation0]]
  $region45: #{m5_forward.1} parent=0
    _
  %s6 = ssub.s32 1, %s4
  %s7 = scalar_select 0, %s6, %s4
  loop: start=0, step=1, limit=4
  $region2: #{m5_forward.1} parent=0 // loop_pre_header
    _
  $region3: #{m5_forward.1} parent=0 // loop_header
    %s9 = sphi 0, %s13
    %p10 = scmp.ge.s32.totalorder %s9, 4
    %s19 = sphi 0, %s21
    %s22 = sphi 0, %s19
    %s23 = sphi 0, %s22
    %s39 = sphi 0, %s23
    %s43 = sphi 0, %s43
    %s45 = sphi 0, %s43
    %s46 = sphi 0, %s45
    %s60 = sphi 0, %s46
    %s64 = sphi 0, %s64
    %s66 = sphi 0, %s64
    %s67 = sphi 0, %s66
    %s81 = sphi 0, %s67
    %s87 = sphi 0, %s89
    %s90 = sphi 0, %s87
    %s91 = sphi 0, %s90
    %s107 = sphi 0, %s91
  $region4: #{m5_forward.1} parent=0 // loop_header_branch
    %12 = sbr.rel (%p10) target = $region8
  $region5: #{m5_forward.1} parent=0 // loop_body
    %s14 = ssub.s32 %s9, 1
    %s15 = ssub.s32 %s9, 2
    %s16 = sadd.s32 %s9, 1
    %s17 = ssub.s32 %s9, %s16
    %p18 = scmp.eq.s32.totalorder %s17, 0
    %s20 = sadd.s32 %s19, 1
    %s21 = scalar_select %p18, %s19, %s20
    %p24 = pneg %p18
    %p25 = scmp.eq.s32.totalorder %s9, 1
    %p26 = por %p24, %p25
    %p27 = scmp.ne.s32.totalorder %s19, %s22
    %p28 = scmp.eq.s32.totalorder %s9, 0
    %p29 = por %p27, %p28
    %p30 = scmp.ne.s32.totalorder %s19, %s22
    %p31 = scmp.eq.s32.totalorder %s14, 1
    %p32 = por %p30, %p31
    %p33 = scmp.ne.s32.totalorder %s22, %s23
    %p34 = scmp.eq.s32.totalorder %s14, 0
    %p35 = por %p33, %p34
    %p36 = scmp.ne.s32.totalorder %s22, %s23
    %p37 = scmp.eq.s32.totalorder %s15, 1
    %p38 = por %p36, %p37
    %p40 = scmp.ne.s32.totalorder %s23, %s39
    %p41 = scmp.eq.s32.totalorder %s15, 0
    %p42 = por %p40, %p41
    %s44 = sadd.s32 %s43, 1
    %p47 = scmp.eq.s32.totalorder %s9, 1
    %p48 = scmp.ne.s32.totalorder %s43, %s45
    %p49 = scmp.eq.s32.totalorder %s9, 0
    %p50 = por %p48, %p49
    %p51 = scmp.ne.s32.totalorder %s43, %s45
    %p52 = scmp.eq.s32.totalorder %s14, 1
    %p53 = por %p51, %p52
    %p54 = scmp.ne.s32.totalorder %s45, %s46
    %p55 = scmp.eq.s32.totalorder %s14, 0
    %p56 = por %p54, %p55
    %p57 = scmp.ne.s32.totalorder %s45, %s46
    %p58 = scmp.eq.s32.totalorder %s15, 1
    %p59 = por %p57, %p58
    %p61 = scmp.ne.s32.totalorder %s46, %s60
    %p62 = scmp.eq.s32.totalorder %s15, 0
    %p63 = por %p61, %p62
    %s65 = sadd.s32 %s64, 1
    %p68 = scmp.eq.s32.totalorder %s9, 1
    %p69 = scmp.ne.s32.totalorder %s64, %s66
    %p70 = scmp.eq.s32.totalorder %s9, 0
    %p71 = por %p69, %p70
    %p72 = scmp.ne.s32.totalorder %s64, %s66
    %p73 = scmp.eq.s32.totalorder %s14, 1
    %p74 = por %p72, %p73
    %p75 = scmp.ne.s32.totalorder %s66, %s67
    %p76 = scmp.eq.s32.totalorder %s14, 0
    %p77 = por %p75, %p76
    %p78 = scmp.ne.s32.totalorder %s66, %s67
    %p79 = scmp.eq.s32.totalorder %s15, 1
    %p80 = por %p78, %p79
    %p82 = scmp.ne.s32.totalorder %s67, %s81
    %p83 = scmp.eq.s32.totalorder %s15, 0
    %p84 = por %p82, %p83
    %s85 = ssub.s32 %s9, %s16
    %p86 = scmp.eq.s32.totalorder %s85, 0
    %s88 = sadd.s32 %s87, 1
    %s89 = scalar_select %p86, %s87, %s88
    %p92 = pneg %p86
    %p93 = scmp.eq.s32.totalorder %s9, 1
    %p94 = por %p92, %p93
    %p95 = scmp.ne.s32.totalorder %s87, %s90
    %p96 = scmp.eq.s32.totalorder %s9, 0
    %p97 = por %p95, %p96
    %p98 = scmp.ne.s32.totalorder %s87, %s90
    %p99 = scmp.eq.s32.totalorder %s14, 1
    %p100 = por %p98, %p99
    %p101 = scmp.ne.s32.totalorder %s90, %s91
    %p102 = scmp.eq.s32.totalorder %s14, 0
    %p103 = por %p101, %p102
    %p104 = scmp.ne.s32.totalorder %s90, %s91
    %p105 = scmp.eq.s32.totalorder %s15, 1
    %p106 = por %p104, %p105
    %p108 = scmp.ne.s32.totalorder %s91, %s107
    %p109 = scmp.eq.s32.totalorder %s15, 0
    %p110 = por %p108, %p109
    %p111 = scmp.le.s32.totalorder 1, %s9
    %p112 = scmp.lt.s32.totalorder %s9, 3
    %p113 = pnand %p111, %p112
    %p114 = pneg %p113
    // Predicated region
    $region9: #{m5_forward.1} parent=5 // pred_check
      _
    $region10: #{m5_forward.1} parent=5 // pred_check_branch
      %116 = sbr.rel (%p113) target = $region12
    $region11: #{m5_forward.1} parent=5 // pred_region
      %s117 = ssub.s32 %s9, 1
      // Predicated region
      $region13: #{m5_forward.1} parent=11 // pred_check
        %p118 = pneg %p56
      $region14: #{m5_forward.1} parent=11 // pred_check_branch
        %120 = sbr.rel (%p118) target = $region16
      $region15: #{m5_forward.1} parent=11 // pred_region
        _
      $region16: #{m5_forward.1} parent=11 // pred_fallthru
        _
      // Predicated region
      $region17: #{m5_forward.1} parent=11 // pred_check
        %p121 = pneg %p77
      $region18: #{m5_forward.1} parent=11 // pred_check_branch
        %123 = sbr.rel (%p121) target = $region20
      $region19: #{m5_forward.1} parent=11 // pred_region
        _
      $region20: #{m5_forward.1} parent=11 // pred_fallthru
        _
    $region12: #{m5_forward.1} parent=5 // pred_fallthru
      _
    %p124 = scmp.lt.s32.totalorder %s9, 2
    // Predicated region
    $region21: #{m5_forward.1} parent=5 // pred_check
      %p125 = pneg %p124
    $region22: #{m5_forward.1} parent=5 // pred_check_branch
      %127 = sbr.rel (%p125) target = $region24
    $region23: #{m5_forward.1} parent=5 // pred_region
      // Predicated region
      $region25: #{m5_forward.1} parent=23 // pred_check
        %p128 = pneg %p29
      $region26: #{m5_forward.1} parent=23 // pred_check_branch
        %130 = sbr.rel (%p128) target = $region28
      $region27: #{m5_forward.1} parent=23 // pred_region
        %p131 = scmp.lt.s32.totalorder %s9, 1
        %s132 = scalar_select %p131, %s9, 1
        %s133 = smul.addr %s132, 62
        %s134 = smul.addr %s133, 4
        %s135 = scalar_lea.vmem %s0, %s134
      $region28: #{m5_forward.1} parent=23 // pred_fallthru
        _
    $region24: #{m5_forward.1} parent=5 // pred_fallthru
      _
    %p136 = scmp.le.s32.totalorder 1, %s9
    %p137 = scmp.lt.s32.totalorder %s9, 3
    %p138 = pnand %p136, %p137
    %p139 = pneg %p138
    // Predicated region
    $region29: #{m5_forward.1} parent=5 // pred_check
      _
    $region30: #{m5_forward.1} parent=5 // pred_check_branch
      %141 = sbr.rel (%p138) target = $region32
    $region31: #{m5_forward.1} parent=5 // pred_region
      %s142 = ssub.s32 %s9, 1
      %p143 = scmp.lt.s32.totalorder %s14, 1
      %s144 = scalar_select %p143, %s14, 1
      %s145 = smul.addr %s144, 62
      %s146 = smul.addr %s145, 4
      %s147 = scalar_lea.vmem %s0, %s146
      %p148 = pneg %p35
      %p149 = pneg %p32
      %p150 = pneg %p56
      %p151 = pneg %p53
      %p152 = pneg %p77
      %p153 = pneg %p74
      %p154 = pneg %p103
      %p155 = pneg %p100
      %p156 = scmp.lt.s32.totalorder %s14, 1
      %s157 = scalar_select %p156, %s14, 1
      %s158 = smul.addr %s157, 8
      %s159 = scalar_lea.vmem %s3, %s158
      %p160 = scmp.lt.s32.totalorder %s14, 1
      %s161 = scalar_select %p160, %s14, 1
      %s162 = smul.addr %s161, 62
      %s163 = smul.addr %s162, 4
      %s164 = scalar_lea.vmem %s0, %s163
      %p165 = scmp.lt.s32.totalorder %s14, 1
      %s166 = scalar_select %p165, %s14, 1
      %s167 = smul.addr %s166, 8
      %s168 = scalar_lea.vmem %s3, %s167
      %v170 = vld [vmem:[%s164] sm:$0xf]
      %v171 = vld [vmem:[%s164 + $0x4] sm:$0xf]
      %v172 = vld [vmem:[%s164 + $0x8] sm:$0xf]
      %v173 = vld [vmem:[%s164 + $0xc] sm:$0xf]
      %v174 = vld [vmem:[%s164 + $0x10] sm:$0xf]
      %v175 = vld [vmem:[%s164 + $0x14] sm:$0xf]
      %v176 = vld [vmem:[%s164 + $0x18] sm:$0xf]
      %v177 = vld [vmem:[%s164 + $0x1c] sm:$0xf]
      %v178 = vld [vmem:[%s164 + $0x20] sm:$0xf]
      %v179 = vld [vmem:[%s164 + $0x24] sm:$0xf]
      %v180 = vld [vmem:[%s164 + $0x28] sm:$0xf]
      %v181 = vld [vmem:[%s164 + $0x2c] sm:$0xf]
      %v182 = vld [vmem:[%s164 + $0x30] sm:$0xf]
      %v183 = vld [vmem:[%s164 + $0x34] sm:$0xf]
      %v184 = vld [vmem:[%s164 + $0x38] sm:$0xf]
      %v185 = vld [vmem:[%s164 + $0x3c] sm:$0xf]
      %v186 = vld [vmem:[%s164 + $0x40] sm:$0xf]
      %v187 = vld [vmem:[%s164 + $0x44] sm:$0xf]
      %v188 = vld [vmem:[%s164 + $0x48] sm:$0xf]
      %v189 = vld [vmem:[%s164 + $0x4c] sm:$0xf]
      %v190 = vld [vmem:[%s164 + $0x50] sm:$0xf]
      %v191 = vld [vmem:[%s164 + $0x54] sm:$0xf]
      %v192 = vld [vmem:[%s164 + $0x58] sm:$0xf]
      %v193 = vld [vmem:[%s164 + $0x5c] sm:$0xf]
      %v194 = vld [vmem:[%s164 + $0x60] sm:$0xf]
      %v195 = vld [vmem:[%s164 + $0x64] sm:$0xf]
      %v196 = vld [vmem:[%s164 + $0x68] sm:$0xf]
      %v197 = vld [vmem:[%s164 + $0x6c] sm:$0xf]
      %v198 = vld [vmem:[%s164 + $0x70] sm:$0xf]
      %v199 = vld [vmem:[%s164 + $0x74] sm:$0xf]
      %v200 = vld [vmem:[%s164 + $0x78] sm:$0xf]
      %v201 = vld [vmem:[%s164 + $0x7c] sm:$0xf]
      %v202 = vld [vmem:[%s164 + $0x80] sm:$0xf]
      %v203 = vld [vmem:[%s164 + $0x84] sm:$0xf]
      %v204 = vld [vmem:[%s164 + $0x88] sm:$0xf]
      %v205 = vld [vmem:[%s164 + $0x8c] sm:$0xf]
      %v206 = vld [vmem:[%s164 + $0x90] sm:$0xf]
      %v207 = vld [vmem:[%s164 + $0x94] sm:$0xf]
      %v208 = vld [vmem:[%s164 + $0x98] sm:$0xf]
      %v209 = vld [vmem:[%s164 + $0x9c] sm:$0xf]
      %v210 = vld [vmem:[%s164 + $0xa0] sm:$0xf]
      %v211 = vld [vmem:[%s164 + $0xa4] sm:$0xf]
      %v212 = vld [vmem:[%s164 + $0xa8] sm:$0xf]
      %v213 = vld [vmem:[%s164 + $0xac] sm:$0xf]
      %v214 = vld [vmem:[%s164 + $0xb0] sm:$0xf]
      %v215 = vld [vmem:[%s164 + $0xb4] sm:$0xf]
      %v216 = vld [vmem:[%s164 + $0xb8] sm:$0xf]
      %v217 = vld [vmem:[%s164 + $0xbc] sm:$0xf]
      %v218 = vld [vmem:[%s164 + $0xc0] sm:$0xf]
      %v219 = vld [vmem:[%s164 + $0xc4] sm:$0xf]
      %v220 = vld [vmem:[%s164 + $0xc8] sm:$0xf]
      %v221 = vld [vmem:[%s164 + $0xcc] sm:$0xf]
      %v222 = vld [vmem:[%s164 + $0xd0] sm:$0xf]
      %v223 = vld [vmem:[%s164 + $0xd4] sm:$0xf]
      %v224 = vld [vmem:[%s164 + $0xd8] sm:$0xf]
      %v225 = vld [vmem:[%s164 + $0xdc] sm:$0xf]
      %v226 = vld [vmem:[%s164 + $0xe0] sm:$0xf]
      %v227 = vld [vmem:[%s164 + $0xe4] sm:$0xf]
      %v228 = vld [vmem:[%s164 + $0xe8] sm:$0xf]
      %v229 = vld [vmem:[%s164 + $0xec] sm:$0xf]
      %v230 = vld [vmem:[%s164 + $0xf0] sm:$0xf]
      %v231 = vld [vmem:[%s164 + $0xf4] sm:$0xf]
      %v232 = vld [vmem:[%s1] sm:$0xf]
      %v233 = vld [vmem:[%s1 + $0x4] sm:$0xf]
      %v234 = vld [vmem:[%s1 + $0x8] sm:$0xf]
      %v235 = vld [vmem:[%s1 + $0xc] sm:$0xf]
      %v236 = vld [vmem:[%s1 + $0x10] sm:$0xf]
      %v237 = vld [vmem:[%s1 + $0x14] sm:$0xf]
      %v238 = vld [vmem:[%s1 + $0x18] sm:$0xf]
      %v239 = vld [vmem:[%s1 + $0x1c] sm:$0xf]
      %v240 = vld [vmem:[%s1 + $0x20] sm:$0xf]
      %v241 = vld [vmem:[%s1 + $0x24] sm:$0xf]
      %v242 = vld [vmem:[%s2] sm:$0x1]
      %v243 = vlaneseq
      %v244 = vshrl.u32 %v243, 7
      %v245 = vsub.s32 0, %v244
      %v246 = vrot.slane %v242, %v245
      %v309 = vunpack.c.l.b16 %v170
      %v310 = vunpack.c.l.b16 %v171
      %v311 = vunpack.c.l.b16 %v172
      %v312 = vunpack.c.l.b16 %v173
      %v313 = vunpack.c.l.b16 %v174
      %v314 = vunpack.c.l.b16 %v175
      %v315 = vunpack.c.l.b16 %v176
      %v316 = vunpack.c.l.b16 %v177
      %v317 = vunpack.c.l.b16 %v178
      %v318 = vunpack.c.l.b16 %v179
      %v319 = vunpack.c.l.b16 %v180
      %v320 = vunpack.c.l.b16 %v181
      %v321 = vunpack.c.l.b16 %v182
      %v322 = vunpack.c.l.b16 %v183
      %v323 = vunpack.c.l.b16 %v184
      %v324 = vunpack.c.l.b16 %v185
      %v325 = vunpack.c.l.b16 %v186
      %v326 = vunpack.c.l.b16 %v187
      %v327 = vunpack.c.l.b16 %v188
      %v328 = vunpack.c.l.b16 %v189
      %v329 = vunpack.c.l.b16 %v190
      %v330 = vunpack.c.l.b16 %v191
      %v331 = vunpack.c.l.b16 %v192
      %v332 = vunpack.c.l.b16 %v193
      %v333 = vunpack.c.l.b16 %v194
      %v334 = vunpack.c.l.b16 %v195
      %v335 = vunpack.c.l.b16 %v196
      %v336 = vunpack.c.l.b16 %v197
      %v337 = vunpack.c.l.b16 %v198
      %v338 = vunpack.c.l.b16 %v199
      %v339 = vunpack.c.l.b16 %v200
      %v340 = vunpack.c.l.b16 %v201
      %v341 = vunpack.c.l.b16 %v202
      %v342 = vunpack.c.l.b16 %v203
      %v343 = vunpack.c.l.b16 %v204
      %v344 = vunpack.c.l.b16 %v205
      %v345 = vunpack.c.l.b16 %v206
      %v346 = vunpack.c.l.b16 %v207
      %v347 = vunpack.c.l.b16 %v208
      %v348 = vunpack.c.l.b16 %v209
      %v349 = vunpack.c.l.b16 %v210
      %v350 = vunpack.c.l.b16 %v211
      %v351 = vunpack.c.l.b16 %v212
      %v352 = vunpack.c.l.b16 %v213
      %v353 = vunpack.c.l.b16 %v214
      %v354 = vunpack.c.l.b16 %v215
      %v355 = vunpack.c.l.b16 %v216
      %v356 = vunpack.c.l.b16 %v217
      %v357 = vunpack.c.l.b16 %v218
      %v358 = vunpack.c.l.b16 %v219
      %v359 = vunpack.c.l.b16 %v220
      %v360 = vunpack.c.l.b16 %v221
      %v361 = vunpack.c.l.b16 %v222
      %v362 = vunpack.c.l.b16 %v223
      %v363 = vunpack.c.l.b16 %v224
      %v364 = vunpack.c.l.b16 %v225
      %v365 = vunpack.c.l.b16 %v226
      %v366 = vunpack.c.l.b16 %v227
      %v367 = vunpack.c.l.b16 %v228
      %v368 = vunpack.c.l.b16 %v229
      %v369 = vunpack.c.l.b16 %v230
      %v370 = vunpack.c.l.b16 %v231
      %v371 = vpack.c.b16 %v310, %v309
      %v372 = vpack.c.b16 %v312, %v311
      %v373 = vpack.c.b16 %v314, %v313
      %v374 = vpack.c.b16 %v316, %v315
      %v375 = vpack.c.b16 %v318, %v317
      %v376 = vpack.c.b16 %v320, %v319
      %v377 = vpack.c.b16 %v322, %v321
      %v378 = vpack.c.b16 %v324, %v323
      %v379 = vpack.c.b16 %v326, %v325
      %v380 = vpack.c.b16 %v328, %v327
      %v381 = vpack.c.b16 %v330, %v329
      %v382 = vpack.c.b16 %v332, %v331
      %v383 = vpack.c.b16 %v334, %v333
      %v384 = vpack.c.b16 %v336, %v335
      %v385 = vpack.c.b16 %v338, %v337
      %v386 = vpack.c.b16 %v340, %v339
      %v387 = vpack.c.b16 %v342, %v341
      %v388 = vpack.c.b16 %v344, %v343
      %v389 = vpack.c.b16 %v346, %v345
      %v390 = vpack.c.b16 %v348, %v347
      %v391 = vpack.c.b16 %v350, %v349
      %v392 = vpack.c.b16 %v352, %v351
      %v393 = vpack.c.b16 %v354, %v353
      %v394 = vpack.c.b16 %v356, %v355
      %v395 = vpack.c.b16 %v358, %v357
      %v396 = vpack.c.b16 %v360, %v359
      %v397 = vpack.c.b16 %v362, %v361
      %v398 = vpack.c.b16 %v364, %v363
      %v399 = vpack.c.b16 %v366, %v365
      %v400 = vpack.c.b16 %v368, %v367
      %v401 = vpack.c.b16 %v370, %v369
      %v412 = vunpack.c.l.b16 %v232
      %v413 = vunpack.c.l.b16 %v233
      %v414 = vunpack.c.l.b16 %v234
      %v415 = vunpack.c.l.b16 %v235
      %v416 = vunpack.c.l.b16 %v236
      %v417 = vunpack.c.l.b16 %v237
      %v418 = vunpack.c.l.b16 %v238
      %v419 = vunpack.c.l.b16 %v239
      %v420 = vunpack.c.l.b16 %v240
      %v421 = vunpack.c.l.b16 %v241
      %v422 = vpack.c.b16 %v413, %v412
      %v423 = vpack.c.b16 %v415, %v414
      %v424 = vpack.c.b16 %v417, %v416
      %v425 = vpack.c.b16 %v419, %v418
      %v426 = vpack.c.b16 %v421, %v420
      %vm432 = vcmask 654336
      %v434 = vsel %vm432, %v371, 0
      %v437 = vsel %vm432, %v372, 0
      %v440 = vsel %vm432, %v373, 0
      %v443 = vsel %vm432, %v374, 0
      %v446 = vsel %vm432, %v375, 0
      %v449 = vsel %vm432, %v376, 0
      %v452 = vsel %vm432, %v377, 0
      %v455 = vsel %vm432, %v378, 0
      %v458 = vsel %vm432, %v379, 0
      %v461 = vsel %vm432, %v380, 0
      %v464 = vsel %vm432, %v381, 0
      %v467 = vsel %vm432, %v382, 0
      %v470 = vsel %vm432, %v383, 0
      %v473 = vsel %vm432, %v384, 0
      %v476 = vsel %vm432, %v385, 0
      %v479 = vsel %vm432, %v386, 0
      %v482 = vsel %vm432, %v387, 0
      %v485 = vsel %vm432, %v388, 0
      %v488 = vsel %vm432, %v389, 0
      %v491 = vsel %vm432, %v390, 0
      %v494 = vsel %vm432, %v391, 0
      %v497 = vsel %vm432, %v392, 0
      %v500 = vsel %vm432, %v393, 0
      %v503 = vsel %vm432, %v394, 0
      %v506 = vsel %vm432, %v395, 0
      %v509 = vsel %vm432, %v396, 0
      %v512 = vsel %vm432, %v397, 0
      %v515 = vsel %vm432, %v398, 0
      %v518 = vsel %vm432, %v399, 0
      %v521 = vsel %vm432, %v400, 0
      %v524 = vsel %vm432, %v401, 0
      %526 = vmatprep.subr.bf16.mxu0 0
      %527 = vmatpush1.bf16.msra.mxu0 %v422
      %528 = vmatprep.subr.bf16.mxu0 0
      %529 = vmatpush1.bf16.msra.mxu0 %v423
      %530 = vmatprep.subr.bf16.mxu0 0
      %531 = vmatpush1.bf16.msra.mxu0 %v424
      %532 = vmatprep.subr.bf16.mxu0 0
      %533 = vmatpush1.bf16.msra.mxu0 %v425
      %534 = vmatprep.subr.bf16.mxu0 0
      %535 = vmatpush1.bf16.msra.mxu0 %v426
      %536 = vmatprep.subr.bf16.mxu0 0
      %537 = vmatpush1.bf16.msra.mxu0 0
      %538 = vmatprep.subr.bf16.mxu0 0
      %539 = vmatpush1.bf16.msra.mxu0 0
      %540 = vmatprep.subr.bf16.mxu0 0
      %541 = vmatpush1.bf16.msra.mxu0 0
      %542 = vmatprep.subr.bf16.mxu0 0
      %543 = vmatpush1.bf16.msra.mxu0 0
      %544 = vmatprep.subr.bf16.mxu0 0
      %545 = vmatpush1.bf16.msra.mxu0 0
      %546 = vmatprep.subr.bf16.mxu0 0
      %547 = vmatpush1.bf16.msra.mxu0 0
      %548 = vmatprep.subr.bf16.mxu0 0
      %549 = vmatpush1.bf16.msra.mxu0 0
      %550 = vmatprep.subr.bf16.mxu0 0
      %551 = vmatpush1.bf16.msra.mxu0 0
      %552 = vmatprep.subr.bf16.mxu0 0
      %553 = vmatpush1.bf16.msra.mxu0 0
      %554 = vmatprep.subr.bf16.mxu0 0
      %555 = vmatpush1.bf16.msra.mxu0 0
      %556 = vmatprep.subr.bf16.mxu0 0
      %557 = vmatpush1.bf16.msra.mxu0 0
      %558 = vmatprep.mubr.bf16.mxu0 0
      %559 = vmatmul.mubr.bf16.gmra.mrb[0].mxu0 %v434
      %v560 = vpop.f32.mrb[0].mxu0
      %v561 = vadd.f32 %v246, %v560
      %v562 = vpop.f32.mrb[0].mxu0
      %v563 = vpop.f32.mrb[0].mxu0
      %v564 = vadd.f32 %v246, %v563
      %v565 = vpop.f32.mrb[0].mxu0
      %566 = vmatprep.mubr.bf16.mxu0 0
      %567 = vmatmul.mubr.bf16.gmra.mrb[0].mxu0 %v437
      %v568 = vpop.f32.mrb[0].mxu0
      %v569 = vadd.f32 %v246, %v568
      %v570 = vpop.f32.mrb[0].mxu0
      %v571 = vpop.f32.mrb[0].mxu0
      %v572 = vadd.f32 %v246, %v571
      %v573 = vpop.f32.mrb[0].mxu0
      %574 = vmatprep.mubr.bf16.mxu0 0
      %575 = vmatmul.mubr.bf16.gmra.mrb[0].mxu0 %v440
      %v576 = vpop.f32.mrb[0].mxu0
      %v577 = vadd.f32 %v246, %v576
      %v578 = vpop.f32.mrb[0].mxu0
      %v579 = vpop.f32.mrb[0].mxu0
      %v580 = vadd.f32 %v246, %v579
      %v581 = vpop.f32.mrb[0].mxu0
      %582 = vmatprep.mubr.bf16.mxu0 0
      %583 = vmatmul.mubr.bf16.gmra.mrb[0].mxu0 %v443
      %v584 = vpop.f32.mrb[0].mxu0
      %v585 = vadd.f32 %v246, %v584
      %v586 = vpop.f32.mrb[0].mxu0
      %v587 = vpop.f32.mrb[0].mxu0
      %v588 = vadd.f32 %v246, %v587
      %v589 = vpop.f32.mrb[0].mxu0
      %590 = vmatprep.mubr.bf16.mxu0 0
      %591 = vmatmul.mubr.bf16.gmra.mrb[0].mxu0 %v446
      %v592 = vpop.f32.mrb[0].mxu0
      %v593 = vadd.f32 %v246, %v592
      %v594 = vpop.f32.mrb[0].mxu0
      %v595 = vpop.f32.mrb[0].mxu0
      %v596 = vadd.f32 %v246, %v595
      %v597 = vpop.f32.mrb[0].mxu0
      %598 = vmatprep.mubr.bf16.mxu0 0
      %599 = vmatmul.mubr.bf16.gmra.mrb[0].mxu0 %v449
      %v600 = vpop.f32.mrb[0].mxu0
      %v601 = vadd.f32 %v246, %v600
      %v602 = vpop.f32.mrb[0].mxu0
      %v603 = vpop.f32.mrb[0].mxu0
      %v604 = vadd.f32 %v246, %v603
      %v605 = vpop.f32.mrb[0].mxu0
      %606 = vmatprep.mubr.bf16.mxu0 0
      %607 = vmatmul.mubr.bf16.gmra.mrb[0].mxu0 %v452
      %v608 = vpop.f32.mrb[0].mxu0
      %v609 = vadd.f32 %v246, %v608
      %v610 = vpop.f32.mrb[0].mxu0
      %v611 = vpop.f32.mrb[0].mxu0
      %v612 = vadd.f32 %v246, %v611
      %v613 = vpop.f32.mrb[0].mxu0
      %614 = vmatprep.mubr.bf16.mxu0 0
      %615 = vmatmul.mubr.bf16.gmra.mrb[0].mxu0 %v455
      %v616 = vpop.f32.mrb[0].mxu0
      %v617 = vadd.f32 %v246, %v616
      %v618 = vpop.f32.mrb[0].mxu0
      %v619 = vpop.f32.mrb[0].mxu0
      %v620 = vadd.f32 %v246, %v619
      %v621 = vpop.f32.mrb[0].mxu0
      %622 = vmatprep.mubr.bf16.mxu0 0
      %623 = vmatmul.mubr.bf16.gmra.mrb[0].mxu0 %v458
      %v624 = vpop.f32.mrb[0].mxu0
      %v625 = vadd.f32 %v246, %v624
      %v626 = vpop.f32.mrb[0].mxu0
      %v627 = vpop.f32.mrb[0].mxu0
      %v628 = vadd.f32 %v246, %v627
      %v629 = vpop.f32.mrb[0].mxu0
      %630 = vmatprep.mubr.bf16.mxu0 0
      %631 = vmatmul.mubr.bf16.gmra.mrb[0].mxu0 %v461
      %v632 = vpop.f32.mrb[0].mxu0
      %v633 = vadd.f32 %v246, %v632
      %v634 = vpop.f32.mrb[0].mxu0
      %v635 = vpop.f32.mrb[0].mxu0
      %v636 = vadd.f32 %v246, %v635
      %v637 = vpop.f32.mrb[0].mxu0
      %638 = vmatprep.mubr.bf16.mxu0 0
      %639 = vmatmul.mubr.bf16.gmra.mrb[0].mxu0 %v464
      %v640 = vpop.f32.mrb[0].mxu0
      %v641 = vadd.f32 %v246, %v640
      %v642 = vpop.f32.mrb[0].mxu0
      %v643 = vpop.f32.mrb[0].mxu0
      %v644 = vadd.f32 %v246, %v643
      %v645 = vpop.f32.mrb[0].mxu0
      %646 = vmatprep.mubr.bf16.mxu0 0
      %647 = vmatmul.mubr.bf16.gmra.mrb[0].mxu0 %v467
      %v648 = vpop.f32.mrb[0].mxu0
      %v649 = vadd.f32 %v246, %v648
      %v650 = vpop.f32.mrb[0].mxu0
      %v651 = vpop.f32.mrb[0].mxu0
      %v652 = vadd.f32 %v246, %v651
      %v653 = vpop.f32.mrb[0].mxu0
      %654 = vmatprep.mubr.bf16.mxu0 0
      %655 = vmatmul.mubr.bf16.gmra.mrb[0].mxu0 %v470
      %v656 = vpop.f32.mrb[0].mxu0
      %v657 = vadd.f32 %v246, %v656
      %v658 = vpop.f32.mrb[0].mxu0
      %v659 = vpop.f32.mrb[0].mxu0
      %v660 = vadd.f32 %v246, %v659
      %v661 = vpop.f32.mrb[0].mxu0
      %662 = vmatprep.mubr.bf16.mxu0 0
      %663 = vmatmul.mubr.bf16.gmra.mrb[0].mxu0 %v473
      %v664 = vpop.f32.mrb[0].mxu0
      %v665 = vadd.f32 %v246, %v664
      %v666 = vpop.f32.mrb[0].mxu0
      %v667 = vpop.f32.mrb[0].mxu0
      %v668 = vadd.f32 %v246, %v667
      %v669 = vpop.f32.mrb[0].mxu0
      %670 = vmatprep.mubr.bf16.mxu0 0
      %671 = vmatmul.mubr.bf16.gmra.mrb[0].mxu0 %v476
      %v672 = vpop.f32.mrb[0].mxu0
      %v673 = vadd.f32 %v246, %v672
      %v674 = vpop.f32.mrb[0].mxu0
      %v675 = vpop.f32.mrb[0].mxu0
      %v676 = vadd.f32 %v246, %v675
      %v677 = vpop.f32.mrb[0].mxu0
      %678 = vmatprep.mubr.bf16.mxu0 0
      %679 = vmatmul.mubr.bf16.gmra.mrb[0].mxu0 %v479
      %v680 = vpop.f32.mrb[0].mxu0
      %v681 = vadd.f32 %v246, %v680
      %v682 = vpop.f32.mrb[0].mxu0
      %v683 = vpop.f32.mrb[0].mxu0
      %v684 = vadd.f32 %v246, %v683
      %v685 = vpop.f32.mrb[0].mxu0
      %686 = vmatprep.mubr.bf16.mxu0 0
      %687 = vmatmul.mubr.bf16.gmra.mrb[0].mxu0 %v482
      %v688 = vpop.f32.mrb[0].mxu0
      %v689 = vadd.f32 %v246, %v688
      %v690 = vpop.f32.mrb[0].mxu0
      %v691 = vpop.f32.mrb[0].mxu0
      %v692 = vadd.f32 %v246, %v691
      %v693 = vpop.f32.mrb[0].mxu0
      %694 = vmatprep.mubr.bf16.mxu0 0
      %695 = vmatmul.mubr.bf16.gmra.mrb[0].mxu0 %v485
      %v696 = vpop.f32.mrb[0].mxu0
      %v697 = vadd.f32 %v246, %v696
      %v698 = vpop.f32.mrb[0].mxu0
      %v699 = vpop.f32.mrb[0].mxu0
      %v700 = vadd.f32 %v246, %v699
      %v701 = vpop.f32.mrb[0].mxu0
      %702 = vmatprep.mubr.bf16.mxu0 0
      %703 = vmatmul.mubr.bf16.gmra.mrb[0].mxu0 %v488
      %v704 = vpop.f32.mrb[0].mxu0
      %v705 = vadd.f32 %v246, %v704
      %v706 = vpop.f32.mrb[0].mxu0
      %v707 = vpop.f32.mrb[0].mxu0
      %v708 = vadd.f32 %v246, %v707
      %v709 = vpop.f32.mrb[0].mxu0
      %710 = vmatprep.mubr.bf16.mxu0 0
      %711 = vmatmul.mubr.bf16.gmra.mrb[0].mxu0 %v491
      %v712 = vpop.f32.mrb[0].mxu0
      %v713 = vadd.f32 %v246, %v712
      %v714 = vpop.f32.mrb[0].mxu0
      %v715 = vpop.f32.mrb[0].mxu0
      %v716 = vadd.f32 %v246, %v715
      %v717 = vpop.f32.mrb[0].mxu0
      %718 = vmatprep.mubr.bf16.mxu0 0
      %719 = vmatmul.mubr.bf16.gmra.mrb[0].mxu0 %v494
      %v720 = vpop.f32.mrb[0].mxu0
      %v721 = vadd.f32 %v246, %v720
      %v722 = vpop.f32.mrb[0].mxu0
      %v723 = vpop.f32.mrb[0].mxu0
      %v724 = vadd.f32 %v246, %v723
      %v725 = vpop.f32.mrb[0].mxu0
      %726 = vmatprep.mubr.bf16.mxu0 0
      %727 = vmatmul.mubr.bf16.gmra.mrb[0].mxu0 %v497
      %v728 = vpop.f32.mrb[0].mxu0
      %v729 = vadd.f32 %v246, %v728
      %v730 = vpop.f32.mrb[0].mxu0
      %v731 = vpop.f32.mrb[0].mxu0
      %v732 = vadd.f32 %v246, %v731
      %v733 = vpop.f32.mrb[0].mxu0
      %734 = vmatprep.mubr.bf16.mxu0 0
      %735 = vmatmul.mubr.bf16.gmra.mrb[0].mxu0 %v500
      %v736 = vpop.f32.mrb[0].mxu0
      %v737 = vadd.f32 %v246, %v736
      %v738 = vpop.f32.mrb[0].mxu0
      %v739 = vpop.f32.mrb[0].mxu0
      %v740 = vadd.f32 %v246, %v739
      %v741 = vpop.f32.mrb[0].mxu0
      %742 = vmatprep.mubr.bf16.mxu0 0
      %743 = vmatmul.mubr.bf16.gmra.mrb[0].mxu0 %v503
      %v744 = vpop.f32.mrb[0].mxu0
      %v745 = vadd.f32 %v246, %v744
      %v746 = vpop.f32.mrb[0].mxu0
      %v747 = vpop.f32.mrb[0].mxu0
      %v748 = vadd.f32 %v246, %v747
      %v749 = vpop.f32.mrb[0].mxu0
      %750 = vmatprep.mubr.bf16.mxu0 0
      %751 = vmatmul.mubr.bf16.gmra.mrb[0].mxu0 %v506
      %v752 = vpop.f32.mrb[0].mxu0
      %v753 = vadd.f32 %v246, %v752
      %v754 = vpop.f32.mrb[0].mxu0
      %v755 = vpop.f32.mrb[0].mxu0
      %v756 = vadd.f32 %v246, %v755
      %v757 = vpop.f32.mrb[0].mxu0
      %758 = vmatprep.mubr.bf16.mxu0 0
      %759 = vmatmul.mubr.bf16.gmra.mrb[0].mxu0 %v509
      %v760 = vpop.f32.mrb[0].mxu0
      %v761 = vadd.f32 %v246, %v760
      %v762 = vpop.f32.mrb[0].mxu0
      %v763 = vpop.f32.mrb[0].mxu0
      %v764 = vadd.f32 %v246, %v763
      %v765 = vpop.f32.mrb[0].mxu0
      %766 = vmatprep.mubr.bf16.mxu0 0
      %767 = vmatmul.mubr.bf16.gmra.mrb[0].mxu0 %v512
      %v768 = vpop.f32.mrb[0].mxu0
      %v769 = vadd.f32 %v246, %v768
      %v770 = vpop.f32.mrb[0].mxu0
      %v771 = vpop.f32.mrb[0].mxu0
      %v772 = vadd.f32 %v246, %v771
      %v773 = vpop.f32.mrb[0].mxu0
      %774 = vmatprep.mubr.bf16.mxu0 0
      %775 = vmatmul.mubr.bf16.gmra.mrb[0].mxu0 %v515
      %v776 = vpop.f32.mrb[0].mxu0
      %v777 = vadd.f32 %v246, %v776
      %v778 = vpop.f32.mrb[0].mxu0
      %v779 = vpop.f32.mrb[0].mxu0
      %v780 = vadd.f32 %v246, %v779
      %v781 = vpop.f32.mrb[0].mxu0
      %782 = vmatprep.mubr.bf16.mxu0 0
      %783 = vmatmul.mubr.bf16.gmra.mrb[0].mxu0 %v518
      %v784 = vpop.f32.mrb[0].mxu0
      %v785 = vadd.f32 %v246, %v784
      %v786 = vpop.f32.mrb[0].mxu0
      %v787 = vpop.f32.mrb[0].mxu0
      %v788 = vadd.f32 %v246, %v787
      %v789 = vpop.f32.mrb[0].mxu0
      %790 = vmatprep.mubr.bf16.mxu0 0
      %791 = vmatmul.mubr.bf16.gmra.mrb[0].mxu0 %v521
      %v792 = vpop.f32.mrb[0].mxu0
      %v793 = vadd.f32 %v246, %v792
      %v794 = vpop.f32.mrb[0].mxu0
      %v795 = vpop.f32.mrb[0].mxu0
      %v796 = vadd.f32 %v246, %v795
      %v797 = vpop.f32.mrb[0].mxu0
      %798 = vmatprep.mubr.bf16.mxu0 0
      %799 = vmatmul.mubr.bf16.gmra.mrb[0].mxu0 %v524
      %v800 = vpop.f32.mrb[0].mxu0
      %v801 = vadd.f32 %v246, %v800
      %v802 = vpop.f32.mrb[0].mxu0
      %v803 = vpop.f32.mrb[0].mxu0
      %v804 = vadd.f32 %v246, %v803
      %v805 = vpop.f32.mrb[0].mxu0
      %806 = vdwg.mxu0
      %v807 = vmax.f32 %v561, 0.0
      %v808 = vmax.f32 %v564, 0.0
      %v809 = vmax.f32 %v569, 0.0
      %v810 = vmax.f32 %v572, 0.0
      %v811 = vmax.f32 %v577, 0.0
      %v812 = vmax.f32 %v580, 0.0
      %v813 = vmax.f32 %v585, 0.0
      %v814 = vmax.f32 %v588, 0.0
      %v815 = vmax.f32 %v593, 0.0
      %v816 = vmax.f32 %v596, 0.0
      %v817 = vmax.f32 %v601, 0.0
      %v818 = vmax.f32 %v604, 0.0
      %v819 = vmax.f32 %v609, 0.0
      %v820 = vmax.f32 %v612, 0.0
      %v821 = vmax.f32 %v617, 0.0
      %v822 = vmax.f32 %v620, 0.0
      %v823 = vmax.f32 %v625, 0.0
      %v824 = vmax.f32 %v628, 0.0
      %v825 = vmax.f32 %v633, 0.0
      %v826 = vmax.f32 %v636, 0.0
      %v827 = vmax.f32 %v641, 0.0
      %v828 = vmax.f32 %v644, 0.0
      %v829 = vmax.f32 %v649, 0.0
      %v830 = vmax.f32 %v652, 0.0
      %v831 = vmax.f32 %v657, 0.0
      %v832 = vmax.f32 %v660, 0.0
      %v833 = vmax.f32 %v665, 0.0
      %v834 = vmax.f32 %v668, 0.0
      %v835 = vmax.f32 %v673, 0.0
      %v836 = vmax.f32 %v676, 0.0
      %v837 = vmax.f32 %v681, 0.0
      %v838 = vmax.f32 %v684, 0.0
      %v839 = vmax.f32 %v689, 0.0
      %v840 = vmax.f32 %v692, 0.0
      %v841 = vmax.f32 %v697, 0.0
      %v842 = vmax.f32 %v700, 0.0
      %v843 = vmax.f32 %v705, 0.0
      %v844 = vmax.f32 %v708, 0.0
      %v845 = vmax.f32 %v713, 0.0
      %v846 = vmax.f32 %v716, 0.0
      %v847 = vmax.f32 %v721, 0.0
      %v848 = vmax.f32 %v724, 0.0
      %v849 = vmax.f32 %v729, 0.0
      %v850 = vmax.f32 %v732, 0.0
      %v851 = vmax.f32 %v737, 0.0
      %v852 = vmax.f32 %v740, 0.0
      %v853 = vmax.f32 %v745, 0.0
      %v854 = vmax.f32 %v748, 0.0
      %v855 = vmax.f32 %v753, 0.0
      %v856 = vmax.f32 %v756, 0.0
      %v857 = vmax.f32 %v761, 0.0
      %v858 = vmax.f32 %v764, 0.0
      %v859 = vmax.f32 %v769, 0.0
      %v860 = vmax.f32 %v772, 0.0
      %v861 = vmax.f32 %v777, 0.0
      %v862 = vmax.f32 %v780, 0.0
      %v863 = vmax.f32 %v785, 0.0
      %v864 = vmax.f32 %v788, 0.0
      %v865 = vmax.f32 %v793, 0.0
      %v866 = vmax.f32 %v796, 0.0
      %v867 = vmax.f32 %v801, 0.0
      %v868 = vmax.f32 %v804, 0.0
      %vm869 = vcmask 261120
      %870 = vst.msk [vmem:[#allocation2] sm:$0xff] %vm869, %v807
      %871 = vst.msk [vmem:[#allocation2 + $0x8] sm:$0xff] %vm869, %v808
      %872 = vst.msk [vmem:[#allocation2 + $0x10] sm:$0xff] %vm869, %v809
      %873 = vst.msk [vmem:[#allocation2 + $0x18] sm:$0xff] %vm869, %v810
      %874 = vst.msk [vmem:[#allocation2 + $0x20] sm:$0xff] %vm869, %v811
      %875 = vst.msk [vmem:[#allocation2 + $0x28] sm:$0xff] %vm869, %v812
      %876 = vst.msk [vmem:[#allocation2 + $0x30] sm:$0xff] %vm869, %v813
      %877 = vst.msk [vmem:[#allocation2 + $0x38] sm:$0xff] %vm869, %v814
      %878 = vst.msk [vmem:[#allocation2 + $0x40] sm:$0xff] %vm869, %v815
      %879 = vst.msk [vmem:[#allocation2 + $0x48] sm:$0xff] %vm869, %v816
      %880 = vst.msk [vmem:[#allocation2 + $0x50] sm:$0xff] %vm869, %v817
      %881 = vst.msk [vmem:[#allocation2 + $0x58] sm:$0xff] %vm869, %v818
      %882 = vst.msk [vmem:[#allocation2 + $0x60] sm:$0xff] %vm869, %v819
      %883 = vst.msk [vmem:[#allocation2 + $0x68] sm:$0xff] %vm869, %v820
      %884 = vst.msk [vmem:[#allocation2 + $0x70] sm:$0xff] %vm869, %v821
      %885 = vst.msk [vmem:[#allocation2 + $0x78] sm:$0xff] %vm869, %v822
      %886 = vst.msk [vmem:[#allocation2 + $0x80] sm:$0xff] %vm869, %v823
      %887 = vst.msk [vmem:[#allocation2 + $0x88] sm:$0xff] %vm869, %v824
      %888 = vst.msk [vmem:[#allocation2 + $0x90] sm:$0xff] %vm869, %v825
      %889 = vst.msk [vmem:[#allocation2 + $0x98] sm:$0xff] %vm869, %v826
      %890 = vst.msk [vmem:[#allocation2 + $0xa0] sm:$0xff] %vm869, %v827
      %891 = vst.msk [vmem:[#allocation2 + $0xa8] sm:$0xff] %vm869, %v828
      %892 = vst.msk [vmem:[#allocation2 + $0xb0] sm:$0xff] %vm869, %v829
      %893 = vst.msk [vmem:[#allocation2 + $0xb8] sm:$0xff] %vm869, %v830
      %894 = vst.msk [vmem:[#allocation2 + $0xc0] sm:$0xff] %vm869, %v831
      %895 = vst.msk [vmem:[#allocation2 + $0xc8] sm:$0xff] %vm869, %v832
      %896 = vst.msk [vmem:[#allocation2 + $0xd0] sm:$0xff] %vm869, %v833
      %897 = vst.msk [vmem:[#allocation2 + $0xd8] sm:$0xff] %vm869, %v834
      %898 = vst.msk [vmem:[#allocation2 + $0xe0] sm:$0xff] %vm869, %v835
      %899 = vst.msk [vmem:[#allocation2 + $0xe8] sm:$0xff] %vm869, %v836
      %900 = vst.msk [vmem:[#allocation2 + $0xf0] sm:$0xff] %vm869, %v837
      %901 = vst.msk [vmem:[#allocation2 + $0xf8] sm:$0xff] %vm869, %v838
      %902 = vst.msk [vmem:[#allocation2 + $0x100] sm:$0xff] %vm869, %v839
      %903 = vst.msk [vmem:[#allocation2 + $0x108] sm:$0xff] %vm869, %v840
      %904 = vst.msk [vmem:[#allocation2 + $0x110] sm:$0xff] %vm869, %v841
      %905 = vst.msk [vmem:[#allocation2 + $0x118] sm:$0xff] %vm869, %v842
      %906 = vst.msk [vmem:[#allocation2 + $0x120] sm:$0xff] %vm869, %v843
      %907 = vst.msk [vmem:[#allocation2 + $0x128] sm:$0xff] %vm869, %v844
      %908 = vst.msk [vmem:[#allocation2 + $0x130] sm:$0xff] %vm869, %v845
      %909 = vst.msk [vmem:[#allocation2 + $0x138] sm:$0xff] %vm869, %v846
      %910 = vst.msk [vmem:[#allocation2 + $0x140] sm:$0xff] %vm869, %v847
      %911 = vst.msk [vmem:[#allocation2 + $0x148] sm:$0xff] %vm869, %v848
      %912 = vst.msk [vmem:[#allocation2 + $0x150] sm:$0xff] %vm869, %v849
      %913 = vst.msk [vmem:[#allocation2 + $0x158] sm:$0xff] %vm869, %v850
      %914 = vst.msk [vmem:[#allocation2 + $0x160] sm:$0xff] %vm869, %v851
      %915 = vst.msk [vmem:[#allocation2 + $0x168] sm:$0xff] %vm869, %v852
      %916 = vst.msk [vmem:[#allocation2 + $0x170] sm:$0xff] %vm869, %v853
      %917 = vst.msk [vmem:[#allocation2 + $0x178] sm:$0xff] %vm869, %v854
      %918 = vst.msk [vmem:[#allocation2 + $0x180] sm:$0xff] %vm869, %v855
      %919 = vst.msk [vmem:[#allocation2 + $0x188] sm:$0xff] %vm869, %v856
      %920 = vst.msk [vmem:[#allocation2 + $0x190] sm:$0xff] %vm869, %v857
      %921 = vst.msk [vmem:[#allocation2 + $0x198] sm:$0xff] %vm869, %v858
      %922 = vst.msk [vmem:[#allocation2 + $0x1a0] sm:$0xff] %vm869, %v859
      %923 = vst.msk [vmem:[#allocation2 + $0x1a8] sm:$0xff] %vm869, %v860
      %924 = vst.msk [vmem:[#allocation2 + $0x1b0] sm:$0xff] %vm869, %v861
      %925 = vst.msk [vmem:[#allocation2 + $0x1b8] sm:$0xff] %vm869, %v862
      %926 = vst.msk [vmem:[#allocation2 + $0x1c0] sm:$0xff] %vm869, %v863
      %927 = vst.msk [vmem:[#allocation2 + $0x1c8] sm:$0xff] %vm869, %v864
      %928 = vst.msk [vmem:[#allocation2 + $0x1d0] sm:$0xff] %vm869, %v865
      %929 = vst.msk [vmem:[#allocation2 + $0x1d8] sm:$0xff] %vm869, %v866
      %930 = vst.msk [vmem:[#allocation2 + $0x1e0] sm:$0xff] %vm869, %v867
      %931 = vst.msk [vmem:[#allocation2 + $0x1e8] sm:$0xff] %vm869, %v868
      %v932 = vld [vmem:[#allocation2] ss:$4 sm:$0xff]
      %s933 = scalar_lea.vmem [#allocation2], 32
      %v934 = vld [vmem:[%s933] ss:$4 sm:$0xff]
      %s935 = scalar_lea.vmem [#allocation2], 64
      %v936 = vld [vmem:[%s935] ss:$4 sm:$0xff]
      %s937 = scalar_lea.vmem [#allocation2], 96
      %v938 = vld [vmem:[%s937] ss:$4 sm:$0xff]
      %s939 = scalar_lea.vmem [#allocation2], 128
      %v940 = vld [vmem:[%s939] ss:$4 sm:$0xff]
      %s941 = scalar_lea.vmem [#allocation2], 160
      %v942 = vld [vmem:[%s941] ss:$4 sm:$0xff]
      %s943 = scalar_lea.vmem [#allocation2], 192
      %v944 = vld [vmem:[%s943] ss:$4 sm:$0xff]
      %s945 = scalar_lea.vmem [#allocation2], 224
      %v946 = vld [vmem:[%s945] ss:$4 sm:$0xff]
      %s947 = scalar_lea.vmem [#allocation2], 256
      %v948 = vld [vmem:[%s947] ss:$4 sm:$0xff]
      %s949 = scalar_lea.vmem [#allocation2], 288
      %v950 = vld [vmem:[%s949] ss:$4 sm:$0xff]
      %s951 = scalar_lea.vmem [#allocation2], 320
      %v952 = vld [vmem:[%s951] ss:$4 sm:$0xff]
      %s953 = scalar_lea.vmem [#allocation2], 352
      %v954 = vld [vmem:[%s953] ss:$4 sm:$0xff]
      %s955 = scalar_lea.vmem [#allocation2], 384
      %v956 = vld [vmem:[%s955] ss:$4 sm:$0xff]
      %s957 = scalar_lea.vmem [#allocation2], 416
      %v958 = vld [vmem:[%s957] ss:$4 sm:$0xff]
      %s959 = scalar_lea.vmem [#allocation2], 448
      %v960 = vld [vmem:[%s959] ss:$4 sm:$0xff]
      %s961 = scalar_lea.vmem [#allocation2], 480
      %v962 = vld [vmem:[%s961] ss:$4 sm:$0xf]
      %s963 = scalar_lea.vmem [#allocation2], 1
      %v964 = vld [vmem:[%s963] ss:$4 sm:$0xff]
      %s965 = scalar_lea.vmem [#allocation2], 33
      %v966 = vld [vmem:[%s965] ss:$4 sm:$0xff]
      %s967 = scalar_lea.vmem [#allocation2], 65
      %v968 = vld [vmem:[%s967] ss:$4 sm:$0xff]
      %s969 = scalar_lea.vmem [#allocation2], 97
      %v970 = vld [vmem:[%s969] ss:$4 sm:$0xff]
      %s971 = scalar_lea.vmem [#allocation2], 129
      %v972 = vld [vmem:[%s971] ss:$4 sm:$0xff]
      %s973 = scalar_lea.vmem [#allocation2], 161
      %v974 = vld [vmem:[%s973] ss:$4 sm:$0xff]
      %s975 = scalar_lea.vmem [#allocation2], 193
      %v976 = vld [vmem:[%s975] ss:$4 sm:$0xff]
      %s977 = scalar_lea.vmem [#allocation2], 225
      %v978 = vld [vmem:[%s977] ss:$4 sm:$0xff]
      %s979 = scalar_lea.vmem [#allocation2], 257
      %v980 = vld [vmem:[%s979] ss:$4 sm:$0xff]
      %s981 = scalar_lea.vmem [#allocation2], 289
      %v982 = vld [vmem:[%s981] ss:$4 sm:$0xff]
      %s983 = scalar_lea.vmem [#allocation2], 321
      %v984 = vld [vmem:[%s983] ss:$4 sm:$0xff]
      %s985 = scalar_lea.vmem [#allocation2], 353
      %v986 = vld [vmem:[%s985] ss:$4 sm:$0xff]
      %s987 = scalar_lea.vmem [#allocation2], 385
      %v988 = vld [vmem:[%s987] ss:$4 sm:$0xff]
      %s989 = scalar_lea.vmem [#allocation2], 417
      %v990 = vld [vmem:[%s989] ss:$4 sm:$0xff]
      %s991 = scalar_lea.vmem [#allocation2], 449
      %v992 = vld [vmem:[%s991] ss:$4 sm:$0xff]
      %s993 = scalar_lea.vmem [#allocation2], 481
      %v994 = vld [vmem:[%s993] ss:$4 sm:$0xf]
      %s995 = scalar_lea.vmem [#allocation2], 2
      %v996 = vld [vmem:[%s995] ss:$4 sm:$0xff]
      %s997 = scalar_lea.vmem [#allocation2], 34
      %v998 = vld [vmem:[%s997] ss:$4 sm:$0xff]
      %s999 = scalar_lea.vmem [#allocation2], 66
      %v1000 = vld [vmem:[%s999] ss:$4 sm:$0xff]
      %s1001 = scalar_lea.vmem [#allocation2], 98
      %v1002 = vld [vmem:[%s1001] ss:$4 sm:$0xff]
      %s1003 = scalar_lea.vmem [#allocation2], 130
      %v1004 = vld [vmem:[%s1003] ss:$4 sm:$0xff]
      %s1005 = scalar_lea.vmem [#allocation2], 162
      %v1006 = vld [vmem:[%s1005] ss:$4 sm:$0xff]
      %s1007 = scalar_lea.vmem [#allocation2], 194
      %v1008 = vld [vmem:[%s1007] ss:$4 sm:$0xff]
      %s1009 = scalar_lea.vmem [#allocation2], 226
      %v1010 = vld [vmem:[%s1009] ss:$4 sm:$0xff]
      %s1011 = scalar_lea.vmem [#allocation2], 258
      %v1012 = vld [vmem:[%s1011] ss:$4 sm:$0xff]
      %s1013 = scalar_lea.vmem [#allocation2], 290
      %v1014 = vld [vmem:[%s1013] ss:$4 sm:$0xff]
      %s1015 = scalar_lea.vmem [#allocation2], 322
      %v1016 = vld [vmem:[%s1015] ss:$4 sm:$0xff]
      %s1017 = scalar_lea.vmem [#allocation2], 354
      %v1018 = vld [vmem:[%s1017] ss:$4 sm:$0xff]
      %s1019 = scalar_lea.vmem [#allocation2], 386
      %v1020 = vld [vmem:[%s1019] ss:$4 sm:$0xff]
      %s1021 = scalar_lea.vmem [#allocation2], 418
      %v1022 = vld [vmem:[%s1021] ss:$4 sm:$0xff]
      %s1023 = scalar_lea.vmem [#allocation2], 450
      %v1024 = vld [vmem:[%s1023] ss:$4 sm:$0xff]
      %s1025 = scalar_lea.vmem [#allocation2], 482
      %v1026 = vld [vmem:[%s1025] ss:$4 sm:$0xf]
      %s1027 = scalar_lea.vmem [#allocation2], 3
      %v1028 = vld [vmem:[%s1027] ss:$4 sm:$0xff]
      %s1029 = scalar_lea.vmem [#allocation2], 35
      %v1030 = vld [vmem:[%s1029] ss:$4 sm:$0xff]
      %s1031 = scalar_lea.vmem [#allocation2], 67
      %v1032 = vld [vmem:[%s1031] ss:$4 sm:$0xff]
      %s1033 = scalar_lea.vmem [#allocation2], 99
      %v1034 = vld [vmem:[%s1033] ss:$4 sm:$0xff]
      %s1035 = scalar_lea.vmem [#allocation2], 131
      %v1036 = vld [vmem:[%s1035] ss:$4 sm:$0xff]
      %s1037 = scalar_lea.vmem [#allocation2], 163
      %v1038 = vld [vmem:[%s1037] ss:$4 sm:$0xff]
      %s1039 = scalar_lea.vmem [#allocation2], 195
      %v1040 = vld [vmem:[%s1039] ss:$4 sm:$0xff]
      %s1041 = scalar_lea.vmem [#allocation2], 227
      %v1042 = vld [vmem:[%s1041] ss:$4 sm:$0xff]
      %s1043 = scalar_lea.vmem [#allocation2], 259
      %v1044 = vld [vmem:[%s1043] ss:$4 sm:$0xff]
      %s1045 = scalar_lea.vmem [#allocation2], 291
      %v1046 = vld [vmem:[%s1045] ss:$4 sm:$0xff]
      %s1047 = scalar_lea.vmem [#allocation2], 323
      %v1048 = vld [vmem:[%s1047] ss:$4 sm:$0xff]
      %s1049 = scalar_lea.vmem [#allocation2], 355
      %v1050 = vld [vmem:[%s1049] ss:$4 sm:$0xff]
      %s1051 = scalar_lea.vmem [#allocation2], 387
      %v1052 = vld [vmem:[%s1051] ss:$4 sm:$0xff]
      %s1053 = scalar_lea.vmem [#allocation2], 419
      %v1054 = vld [vmem:[%s1053] ss:$4 sm:$0xff]
      %s1055 = scalar_lea.vmem [#allocation2], 451
      %v1056 = vld [vmem:[%s1055] ss:$4 sm:$0xff]
      %s1057 = scalar_lea.vmem [#allocation2], 483
      %v1058 = vld [vmem:[%s1057] ss:$4 sm:$0xf]
      %v1059 = vmax.f32 %v932, %v964
      %v1060 = vmax.f32 %v934, %v966
      %v1061 = vmax.f32 %v936, %v968
      %v1062 = vmax.f32 %v938, %v970
      %v1063 = vmax.f32 %v940, %v972
      %v1064 = vmax.f32 %v942, %v974
      %v1065 = vmax.f32 %v944, %v976
      %v1066 = vmax.f32 %v946, %v978
      %v1067 = vmax.f32 %v948, %v980
      %v1068 = vmax.f32 %v950, %v982
      %v1069 = vmax.f32 %v952, %v984
      %v1070 = vmax.f32 %v954, %v986
      %v1071 = vmax.f32 %v956, %v988
      %v1072 = vmax.f32 %v958, %v990
      %v1073 = vmax.f32 %v960, %v992
      %v1074 = vmax.f32 %v962, %v994
      %v1075 = vmax.f32 %v996, %v1028
      %v1076 = vmax.f32 %v998, %v1030
      %v1077 = vmax.f32 %v1000, %v1032
      %v1078 = vmax.f32 %v1002, %v1034
      %v1079 = vmax.f32 %v1004, %v1036
      %v1080 = vmax.f32 %v1006, %v1038
      %v1081 = vmax.f32 %v1008, %v1040
      %v1082 = vmax.f32 %v1010, %v1042
      %v1083 = vmax.f32 %v1012, %v1044
      %v1084 = vmax.f32 %v1014, %v1046
      %v1085 = vmax.f32 %v1016, %v1048
      %v1086 = vmax.f32 %v1018, %v1050
      %v1087 = vmax.f32 %v1020, %v1052
      %v1088 = vmax.f32 %v1022, %v1054
      %v1089 = vmax.f32 %v1024, %v1056
      %v1090 = vmax.f32 %v1026, %v1058
      %v1091 = vmax.f32 %v1059, %v1075
      %v1092 = vmax.f32 %v1060, %v1076
      %v1093 = vmax.f32 %v1061, %v1077
      %v1094 = vmax.f32 %v1062, %v1078
      %v1095 = vmax.f32 %v1063, %v1079
      %v1096 = vmax.f32 %v1064, %v1080
      %v1097 = vmax.f32 %v1065, %v1081
      %v1098 = vmax.f32 %v1066, %v1082
      %v1099 = vmax.f32 %v1067, %v1083
      %v1100 = vmax.f32 %v1068, %v1084
      %v1101 = vmax.f32 %v1069, %v1085
      %v1102 = vmax.f32 %v1070, %v1086
      %v1103 = vmax.f32 %v1071, %v1087
      %v1104 = vmax.f32 %v1072, %v1088
      %v1105 = vmax.f32 %v1073, %v1089
      %v1106 = vmax.f32 %v1074, %v1090
      %1107 = vst.msk [vmem:[#allocation3] sm:$0xff] %vm869, %v1091
      %1108 = vst.msk [vmem:[#allocation3 + $0x8] sm:$0xff] %vm869, %v1092
      %1109 = vst.msk [vmem:[#allocation3 + $0x10] sm:$0xff] %vm869, %v1093
      %1110 = vst.msk [vmem:[#allocation3 + $0x18] sm:$0xff] %vm869, %v1094
      %1111 = vst.msk [vmem:[#allocation3 + $0x20] sm:$0xff] %vm869, %v1095
      %1112 = vst.msk [vmem:[#allocation3 + $0x28] sm:$0xff] %vm869, %v1096
      %1113 = vst.msk [vmem:[#allocation3 + $0x30] sm:$0xff] %vm869, %v1097
      %1114 = vst.msk [vmem:[#allocation3 + $0x38] sm:$0xff] %vm869, %v1098
      %1115 = vst.msk [vmem:[#allocation3 + $0x40] sm:$0xff] %vm869, %v1099
      %1116 = vst.msk [vmem:[#allocation3 + $0x48] sm:$0xff] %vm869, %v1100
      %1117 = vst.msk [vmem:[#allocation3 + $0x50] sm:$0xff] %vm869, %v1101
      %1118 = vst.msk [vmem:[#allocation3 + $0x58] sm:$0xff] %vm869, %v1102
      %1119 = vst.msk [vmem:[#allocation3 + $0x60] sm:$0xff] %vm869, %v1103
      %1120 = vst.msk [vmem:[#allocation3 + $0x68] sm:$0xff] %vm869, %v1104
      %1121 = vst.msk [vmem:[#allocation3 + $0x70] sm:$0xff] %vm869, %v1105
      %vm1122 = vcmask 257024
      %1123 = vst.msk [vmem:[#allocation3 + $0x78] sm:$0xf] %vm1122, %v1106
      %v1124 = vld [vmem:[#allocation3] sm:$0xff]
      %v1125 = vld [vmem:[#allocation3 + $0x8] sm:$0xff]
      %v1126 = vld [vmem:[#allocation3 + $0x10] sm:$0xff]
      %v1127 = vld [vmem:[#allocation3 + $0x18] sm:$0xff]
      %v1128 = vld [vmem:[#allocation3 + $0x20] sm:$0xff]
      %v1129 = vld [vmem:[#allocation3 + $0x28] sm:$0xff]
      %v1130 = vld [vmem:[#allocation3 + $0x30] sm:$0xff]
      %v1131 = vld [vmem:[#allocation3 + $0x38] sm:$0xff]
      %v1132 = vld [vmem:[#allocation3 + $0x40] sm:$0xff]
      %v1133 = vld [vmem:[#allocation3 + $0x48] sm:$0xff]
      %v1134 = vld [vmem:[#allocation3 + $0x50] sm:$0xff]
      %v1135 = vld [vmem:[#allocation3 + $0x58] sm:$0xff]
      %v1136 = vld [vmem:[#allocation3 + $0x60] sm:$0xff]
      %v1137 = vld [vmem:[#allocation3 + $0x68] sm:$0xff]
      %v1138 = vld [vmem:[#allocation3 + $0x70] sm:$0xff]
      %v1139 = vld [vmem:[#allocation3 + $0x78] sm:$0x3]
      %v1140 = vpack.c.bf16 %v1125, %v1124
      %v1141 = vpack.c.bf16 %v1127, %v1126
      %v1142 = vpack.c.bf16 %v1129, %v1128
      %v1143 = vpack.c.bf16 %v1131, %v1130
      %v1144 = vpack.c.bf16 %v1133, %v1132
      %v1145 = vpack.c.bf16 %v1135, %v1134
      %v1146 = vpack.c.bf16 %v1137, %v1136
      %v1147 = vpack.c.bf16 %v1139, %v1138
      %v1156 = vunpack.c.l.b16 %v1140
      %v1157 = vunpack.c.h.b16 %v1140
      %v1158 = vunpack.c.l.b16 %v1141
      %v1159 = vunpack.c.h.b16 %v1141
      %v1160 = vunpack.c.l.b16 %v1142
      %v1161 = vunpack.c.h.b16 %v1142
      %v1162 = vunpack.c.l.b16 %v1143
      %v1163 = vunpack.c.h.b16 %v1143
      %v1164 = vunpack.c.l.b16 %v1144
      %v1165 = vunpack.c.h.b16 %v1144
      %v1166 = vunpack.c.l.b16 %v1145
      %v1167 = vunpack.c.h.b16 %v1145
      %v1168 = vunpack.c.l.b16 %v1146
      %v1169 = vunpack.c.h.b16 %v1146
      %v1170 = vunpack.c.l.b16 %v1147
      %v1171 = vunpack.c.h.b16 %v1147
      %v1172 = vpack.c.b16 %v1156, %v1156
      %v1173 = vpack.c.b16 %v1157, %v1157
      %v1174 = vpack.c.b16 %v1158, %v1158
      %v1175 = vpack.c.b16 %v1159, %v1159
      %v1176 = vpack.c.b16 %v1160, %v1160
      %v1177 = vpack.c.b16 %v1161, %v1161
      %v1178 = vpack.c.b16 %v1162, %v1162
      %v1179 = vpack.c.b16 %v1163, %v1163
      %v1180 = vpack.c.b16 %v1164, %v1164
      %v1181 = vpack.c.b16 %v1165, %v1165
      %v1182 = vpack.c.b16 %v1166, %v1166
      %v1183 = vpack.c.b16 %v1167, %v1167
      %v1184 = vpack.c.b16 %v1168, %v1168
      %v1185 = vpack.c.b16 %v1169, %v1169
      %v1186 = vpack.c.b16 %v1170, %v1170
      %v1187 = vpack.c.b16 %v1171, %v1171
      %1204 = vst.msk [vmem:[#allocation4] sm:$0xf] %vm1122, %v1172
      %1205 = vst.msk [vmem:[#allocation4 + $0x4] sm:$0xf] %vm1122, %v1173
      %1206 = vst.msk [vmem:[#allocation4 + $0x8] sm:$0xf] %vm1122, %v1174
      %1207 = vst.msk [vmem:[#allocation4 + $0xc] sm:$0xf] %vm1122, %v1175
      %1208 = vst.msk [vmem:[#allocation4 + $0x10] sm:$0xf] %vm1122, %v1176
      %1209 = vst.msk [vmem:[#allocation4 + $0x14] sm:$0xf] %vm1122, %v1177
      %1210 = vst.msk [vmem:[#allocation4 + $0x18] sm:$0xf] %vm1122, %v1178
      %1211 = vst.msk [vmem:[#allocation4 + $0x1c] sm:$0xf] %vm1122, %v1179
      %1212 = vst.msk [vmem:[#allocation4 + $0x20] sm:$0xf] %vm1122, %v1180
      %1213 = vst.msk [vmem:[#allocation4 + $0x24] sm:$0xf] %vm1122, %v1181
      %1214 = vst.msk [vmem:[#allocation4 + $0x28] sm:$0xf] %vm1122, %v1182
      %1215 = vst.msk [vmem:[#allocation4 + $0x2c] sm:$0xf] %vm1122, %v1183
      %1216 = vst.msk [vmem:[#allocation4 + $0x30] sm:$0xf] %vm1122, %v1184
      %1217 = vst.msk [vmem:[#allocation4 + $0x34] sm:$0xf] %vm1122, %v1185
      %1218 = vst.msk [vmem:[#allocation4 + $0x38] sm:$0xf] %vm1122, %v1186
      %vm1219 = vcmask 253952
      %1220 = vst.msk [vmem:[#allocation4 + $0x3c] sm:$0x1] %vm1219, %v1187
      %v1221 = vld [vmem:[#allocation3 + $0x1] sm:$0xff]
      %v1222 = vld [vmem:[#allocation3 + $0x9] sm:$0xff]
      %v1223 = vld [vmem:[#allocation3 + $0x11] sm:$0xff]
      %v1224 = vld [vmem:[#allocation3 + $0x19] sm:$0xff]
      %v1225 = vld [vmem:[#allocation3 + $0x21] sm:$0xff]
      %v1226 = vld [vmem:[#allocation3 + $0x29] sm:$0xff]
      %v1227 = vld [vmem:[#allocation3 + $0x31] sm:$0xff]
      %v1228 = vld [vmem:[#allocation3 + $0x39] sm:$0xff]
      %v1229 = vld [vmem:[#allocation3 + $0x41] sm:$0xff]
      %v1230 = vld [vmem:[#allocation3 + $0x49] sm:$0xff]
      %v1231 = vld [vmem:[#allocation3 + $0x51] sm:$0xff]
      %v1232 = vld [vmem:[#allocation3 + $0x59] sm:$0xff]
      %v1233 = vld [vmem:[#allocation3 + $0x61] sm:$0xff]
      %v1234 = vld [vmem:[#allocation3 + $0x69] sm:$0xff]
      %v1235 = vld [vmem:[#allocation3 + $0x71] sm:$0xff]
      %v1236 = vld [vmem:[#allocation3 + $0x79] sm:$0x3]
      %v1237 = vpack.c.bf16 %v1222, %v1221
      %v1238 = vpack.c.bf16 %v1224, %v1223
      %v1239 = vpack.c.bf16 %v1226, %v1225
      %v1240 = vpack.c.bf16 %v1228, %v1227
      %v1241 = vpack.c.bf16 %v1230, %v1229
      %v1242 = vpack.c.bf16 %v1232, %v1231
      %v1243 = vpack.c.bf16 %v1234, %v1233
      %v1244 = vpack.c.bf16 %v1236, %v1235
      %v1253 = vunpack.c.l.b16 %v1237
      %v1254 = vunpack.c.h.b16 %v1237
      %v1255 = vunpack.c.l.b16 %v1238
      %v1256 = vunpack.c.h.b16 %v1238
      %v1257 = vunpack.c.l.b16 %v1239
      %v1258 = vunpack.c.h.b16 %v1239
      %v1259 = vunpack.c.l.b16 %v1240
      %v1260 = vunpack.c.h.b16 %v1240
      %v1261 = vunpack.c.l.b16 %v1241
      %v1262 = vunpack.c.h.b16 %v1241
      %v1263 = vunpack.c.l.b16 %v1242
      %v1264 = vunpack.c.h.b16 %v1242
      %v1265 = vunpack.c.l.b16 %v1243
      %v1266 = vunpack.c.h.b16 %v1243
      %v1267 = vunpack.c.l.b16 %v1244
      %v1268 = vunpack.c.h.b16 %v1244
      %v1269 = vpack.c.b16 %v1253, %v1253
      %v1270 = vpack.c.b16 %v1254, %v1254
      %v1271 = vpack.c.b16 %v1255, %v1255
      %v1272 = vpack.c.b16 %v1256, %v1256
      %v1273 = vpack.c.b16 %v1257, %v1257
      %v1274 = vpack.c.b16 %v1258, %v1258
      %v1275 = vpack.c.b16 %v1259, %v1259
      %v1276 = vpack.c.b16 %v1260, %v1260
      %v1277 = vpack.c.b16 %v1261, %v1261
      %v1278 = vpack.c.b16 %v1262, %v1262
      %v1279 = vpack.c.b16 %v1263, %v1263
      %v1280 = vpack.c.b16 %v1264, %v1264
      %v1281 = vpack.c.b16 %v1265, %v1265
      %v1282 = vpack.c.b16 %v1266, %v1266
      %v1283 = vpack.c.b16 %v1267, %v1267
      %v1284 = vpack.c.b16 %v1268, %v1268
      %1285 = vrot.lane.b32.xlu0 %v1269, 32
      %v1286 = vpop.permute.xlu0 %1285
      %1287 = vrot.lane.b32.xlu0 %v1270, 32
      %v1288 = vpop.permute.xlu0 %1287
      %1289 = vrot.lane.b32.xlu0 %v1271, 32
      %v1290 = vpop.permute.xlu0 %1289
      %1291 = vrot.lane.b32.xlu0 %v1272, 32
      %v1292 = vpop.permute.xlu0 %1291
      %1293 = vrot.lane.b32.xlu0 %v1273, 32
      %v1294 = vpop.permute.xlu0 %1293
      %1295 = vrot.lane.b32.xlu0 %v1274, 32
      %v1296 = vpop.permute.xlu0 %1295
      %1297 = vrot.lane.b32.xlu0 %v1275, 32
      %v1298 = vpop.permute.xlu0 %1297
      %1299 = vrot.lane.b32.xlu0 %v1276, 32
      %v1300 = vpop.permute.xlu0 %1299
      %1301 = vrot.lane.b32.xlu0 %v1277, 32
      %v1302 = vpop.permute.xlu0 %1301
      %1303 = vrot.lane.b32.xlu0 %v1278, 32
      %v1304 = vpop.permute.xlu0 %1303
      %1305 = vrot.lane.b32.xlu0 %v1279, 32
      %v1306 = vpop.permute.xlu0 %1305
      %1307 = vrot.lane.b32.xlu0 %v1280, 32
      %v1308 = vpop.permute.xlu0 %1307
      %1309 = vrot.lane.b32.xlu0 %v1281, 32
      %v1310 = vpop.permute.xlu0 %1309
      %1311 = vrot.lane.b32.xlu0 %v1282, 32
      %v1312 = vpop.permute.xlu0 %1311
      %1313 = vrot.lane.b32.xlu0 %v1283, 32
      %v1314 = vpop.permute.xlu0 %1313
      %1315 = vrot.lane.b32.xlu0 %v1284, 32
      %v1316 = vpop.permute.xlu0 %1315
      %vm1333 = vcmask 519424
      %1334 = vst.msk [vmem:[#allocation4] sm:$0xf] %vm1333, %v1286
      %1335 = vst.msk [vmem:[#allocation4 + $0x4] sm:$0xf] %vm1333, %v1288
      %1336 = vst.msk [vmem:[#allocation4 + $0x8] sm:$0xf] %vm1333, %v1290
      %1337 = vst.msk [vmem:[#allocation4 + $0xc] sm:$0xf] %vm1333, %v1292
      %1338 = vst.msk [vmem:[#allocation4 + $0x10] sm:$0xf] %vm1333, %v1294
      %1339 = vst.msk [vmem:[#allocation4 + $0x14] sm:$0xf] %vm1333, %v1296
      %1340 = vst.msk [vmem:[#allocation4 + $0x18] sm:$0xf] %vm1333, %v1298
      %1341 = vst.msk [vmem:[#allocation4 + $0x1c] sm:$0xf] %vm1333, %v1300
      %1342 = vst.msk [vmem:[#allocation4 + $0x20] sm:$0xf] %vm1333, %v1302
      %1343 = vst.msk [vmem:[#allocation4 + $0x24] sm:$0xf] %vm1333, %v1304
      %1344 = vst.msk [vmem:[#allocation4 + $0x28] sm:$0xf] %vm1333, %v1306
      %1345 = vst.msk [vmem:[#allocation4 + $0x2c] sm:$0xf] %vm1333, %v1308
      %1346 = vst.msk [vmem:[#allocation4 + $0x30] sm:$0xf] %vm1333, %v1310
      %1347 = vst.msk [vmem:[#allocation4 + $0x34] sm:$0xf] %vm1333, %v1312
      %1348 = vst.msk [vmem:[#allocation4 + $0x38] sm:$0xf] %vm1333, %v1314
      %vm1349 = vcmask 516352
      %1350 = vst.msk [vmem:[#allocation4 + $0x3c] sm:$0x1] %vm1349, %v1316
      %v1351 = vld [vmem:[#allocation3 + $0x2] sm:$0xff]
      %v1352 = vld [vmem:[#allocation3 + $0xa] sm:$0xff]
      %v1353 = vld [vmem:[#allocation3 + $0x12] sm:$0xff]
      %v1354 = vld [vmem:[#allocation3 + $0x1a] sm:$0xff]
      %v1355 = vld [vmem:[#allocation3 + $0x22] sm:$0xff]
      %v1356 = vld [vmem:[#allocation3 + $0x2a] sm:$0xff]
      %v1357 = vld [vmem:[#allocation3 + $0x32] sm:$0xff]
      %v1358 = vld [vmem:[#allocation3 + $0x3a] sm:$0xff]
      %v1359 = vld [vmem:[#allocation3 + $0x42] sm:$0xff]
      %v1360 = vld [vmem:[#allocation3 + $0x4a] sm:$0xff]
      %v1361 = vld [vmem:[#allocation3 + $0x52] sm:$0xff]
      %v1362 = vld [vmem:[#allocation3 + $0x5a] sm:$0xff]
      %v1363 = vld [vmem:[#allocation3 + $0x62] sm:$0xff]
      %v1364 = vld [vmem:[#allocation3 + $0x6a] sm:$0xff]
      %v1365 = vld [vmem:[#allocation3 + $0x72] sm:$0xff]
      %v1366 = vld [vmem:[#allocation3 + $0x7a] sm:$0x3]
      %v1367 = vpack.c.bf16 %v1352, %v1351
      %v1368 = vpack.c.bf16 %v1354, %v1353
      %v1369 = vpack.c.bf16 %v1356, %v1355
      %v1370 = vpack.c.bf16 %v1358, %v1357
      %v1371 = vpack.c.bf16 %v1360, %v1359
      %v1372 = vpack.c.bf16 %v1362, %v1361
      %v1373 = vpack.c.bf16 %v1364, %v1363
      %v1374 = vpack.c.bf16 %v1366, %v1365
      %v1383 = vunpack.c.l.b16 %v1367
      %v1384 = vunpack.c.h.b16 %v1367
      %v1385 = vunpack.c.l.b16 %v1368
      %v1386 = vunpack.c.h.b16 %v1368
      %v1387 = vunpack.c.l.b16 %v1369
      %v1388 = vunpack.c.h.b16 %v1369
      %v1389 = vunpack.c.l.b16 %v1370
      %v1390 = vunpack.c.h.b16 %v1370
      %v1391 = vunpack.c.l.b16 %v1371
      %v1392 = vunpack.c.h.b16 %v1371
      %v1393 = vunpack.c.l.b16 %v1372
      %v1394 = vunpack.c.h.b16 %v1372
      %v1395 = vunpack.c.l.b16 %v1373
      %v1396 = vunpack.c.h.b16 %v1373
      %v1397 = vunpack.c.l.b16 %v1374
      %v1398 = vunpack.c.h.b16 %v1374
      %v1399 = vpack.c.b16 %v1383, %v1383
      %v1400 = vpack.c.b16 %v1384, %v1384
      %v1401 = vpack.c.b16 %v1385, %v1385
      %v1402 = vpack.c.b16 %v1386, %v1386
      %v1403 = vpack.c.b16 %v1387, %v1387
      %v1404 = vpack.c.b16 %v1388, %v1388
      %v1405 = vpack.c.b16 %v1389, %v1389
      %v1406 = vpack.c.b16 %v1390, %v1390
      %v1407 = vpack.c.b16 %v1391, %v1391
      %v1408 = vpack.c.b16 %v1392, %v1392
      %v1409 = vpack.c.b16 %v1393, %v1393
      %v1410 = vpack.c.b16 %v1394, %v1394
      %v1411 = vpack.c.b16 %v1395, %v1395
      %v1412 = vpack.c.b16 %v1396, %v1396
      %v1413 = vpack.c.b16 %v1397, %v1397
      %v1414 = vpack.c.b16 %v1398, %v1398
      %1415 = vrot.lane.b32.xlu0 %v1399, 64
      %v1416 = vpop.permute.xlu0 %1415
      %1417 = vrot.lane.b32.xlu0 %v1400, 64
      %v1418 = vpop.permute.xlu0 %1417
      %1419 = vrot.lane.b32.xlu0 %v1401, 64
      %v1420 = vpop.permute.xlu0 %1419
      %1421 = vrot.lane.b32.xlu0 %v1402, 64
      %v1422 = vpop.permute.xlu0 %1421
      %1423 = vrot.lane.b32.xlu0 %v1403, 64
      %v1424 = vpop.permute.xlu0 %1423
      %1425 = vrot.lane.b32.xlu0 %v1404, 64
      %v1426 = vpop.permute.xlu0 %1425
      %1427 = vrot.lane.b32.xlu0 %v1405, 64
      %v1428 = vpop.permute.xlu0 %1427
      %1429 = vrot.lane.b32.xlu0 %v1406, 64
      %v1430 = vpop.permute.xlu0 %1429
      %1431 = vrot.lane.b32.xlu0 %v1407, 64
      %v1432 = vpop.permute.xlu0 %1431
      %1433 = vrot.lane.b32.xlu0 %v1408, 64
      %v1434 = vpop.permute.xlu0 %1433
      %1435 = vrot.lane.b32.xlu0 %v1409, 64
      %v1436 = vpop.permute.xlu0 %1435
      %1437 = vrot.lane.b32.xlu0 %v1410, 64
      %v1438 = vpop.permute.xlu0 %1437
      %1439 = vrot.lane.b32.xlu0 %v1411, 64
      %v1440 = vpop.permute.xlu0 %1439
      %1441 = vrot.lane.b32.xlu0 %v1412, 64
      %v1442 = vpop.permute.xlu0 %1441
      %1443 = vrot.lane.b32.xlu0 %v1413, 64
      %v1444 = vpop.permute.xlu0 %1443
      %1445 = vrot.lane.b32.xlu0 %v1414, 64
      %v1446 = vpop.permute.xlu0 %1445
      %vm1463 = vcmask 781824
      %1464 = vst.msk [vmem:[#allocation4] sm:$0xf] %vm1463, %v1416
      %1465 = vst.msk [vmem:[#allocation4 + $0x4] sm:$0xf] %vm1463, %v1418
      %1466 = vst.msk [vmem:[#allocation4 + $0x8] sm:$0xf] %vm1463, %v1420
      %1467 = vst.msk [vmem:[#allocation4 + $0xc] sm:$0xf] %vm1463, %v1422
      %1468 = vst.msk [vmem:[#allocation4 + $0x10] sm:$0xf] %vm1463, %v1424
      %1469 = vst.msk [vmem:[#allocation4 + $0x14] sm:$0xf] %vm1463, %v1426
      %1470 = vst.msk [vmem:[#allocation4 + $0x18] sm:$0xf] %vm1463, %v1428
      %1471 = vst.msk [vmem:[#allocation4 + $0x1c] sm:$0xf] %vm1463, %v1430
      %1472 = vst.msk [vmem:[#allocation4 + $0x20] sm:$0xf] %vm1463, %v1432
      %1473 = vst.msk [vmem:[#allocation4 + $0x24] sm:$0xf] %vm1463, %v1434
      %1474 = vst.msk [vmem:[#allocation4 + $0x28] sm:$0xf] %vm1463, %v1436
      %1475 = vst.msk [vmem:[#allocation4 + $0x2c] sm:$0xf] %vm1463, %v1438
      %1476 = vst.msk [vmem:[#allocation4 + $0x30] sm:$0xf] %vm1463, %v1440
      %1477 = vst.msk [vmem:[#allocation4 + $0x34] sm:$0xf] %vm1463, %v1442
      %1478 = vst.msk [vmem:[#allocation4 + $0x38] sm:$0xf] %vm1463, %v1444
      %vm1479 = vcmask 778752
      %1480 = vst.msk [vmem:[#allocation4 + $0x3c] sm:$0x1] %vm1479, %v1446
      %v1481 = vld [vmem:[#allocation4] sm:$0xf]
      %v1482 = vld [vmem:[#allocation4 + $0x4] sm:$0xf]
      %v1483 = vld [vmem:[#allocation4 + $0x8] sm:$0xf]
      %v1484 = vld [vmem:[#allocation4 + $0xc] sm:$0xf]
      %v1485 = vld [vmem:[#allocation4 + $0x10] sm:$0xf]
      %v1486 = vld [vmem:[#allocation4 + $0x14] sm:$0xf]
      %v1487 = vld [vmem:[#allocation4 + $0x18] sm:$0xf]
      %v1488 = vld [vmem:[#allocation4 + $0x1c] sm:$0xf]
      %v1489 = vld [vmem:[#allocation4 + $0x20] sm:$0xf]
      %v1490 = vld [vmem:[#allocation4 + $0x24] sm:$0xf]
      %v1491 = vld [vmem:[#allocation4 + $0x28] sm:$0xf]
      %v1492 = vld [vmem:[#allocation4 + $0x2c] sm:$0xf]
      %v1493 = vld [vmem:[#allocation4 + $0x30] sm:$0xf]
      %v1494 = vld [vmem:[#allocation4 + $0x34] sm:$0xf]
      %v1495 = vld [vmem:[#allocation4 + $0x38] sm:$0xf]
      %v1496 = vld [vmem:[#allocation4 + $0x3c] sm:$0x1]
      %v1497 = vld [vmem:[%s1 + $0x28] sm:$0xf]
      %v1498 = vld [vmem:[%s1 + $0x2c] sm:$0xf]
      %v1499 = vld [vmem:[%s1 + $0x30] sm:$0xf]
      %v1500 = vld [vmem:[%s1 + $0x34] sm:$0xf]
      %v1501 = vld [vmem:[%s1 + $0x38] sm:$0xf]
      %v1502 = vld [vmem:[%s1 + $0x3c] sm:$0xf]
      %v1503 = vld [vmem:[%s1 + $0x40] sm:$0xf]
      %v1504 = vld [vmem:[%s1 + $0x44] sm:$0xf]
      %v1505 = vld [vmem:[%s1 + $0x48] sm:$0xf]
      %v1506 = vld [vmem:[%s1 + $0x4c] sm:$0xf]
      %v1507 = vld [vmem:[%s1 + $0x50] sm:$0xf]
      %v1508 = vld [vmem:[%s1 + $0x54] sm:$0xf]
      %v1509 = vld [vmem:[%s2 + $0x1] sm:$0x1]
      %v1510 = vlaneseq
      %v1511 = vshrl.u32 %v1510, 7
      %v1512 = vsub.s32 0, %v1511
      %v1513 = vrot.slane %v1509, %v1512
      %v1530 = vunpack.c.l.b16 %v1481
      %v1531 = vunpack.c.l.b16 %v1482
      %v1532 = vunpack.c.l.b16 %v1483
      %v1533 = vunpack.c.l.b16 %v1484
      %v1534 = vunpack.c.l.b16 %v1485
      %v1535 = vunpack.c.l.b16 %v1486
      %v1536 = vunpack.c.l.b16 %v1487
      %v1537 = vunpack.c.l.b16 %v1488
      %v1538 = vunpack.c.l.b16 %v1489
      %v1539 = vunpack.c.l.b16 %v1490
      %v1540 = vunpack.c.l.b16 %v1491
      %v1541 = vunpack.c.l.b16 %v1492
      %v1542 = vunpack.c.l.b16 %v1493
      %v1543 = vunpack.c.l.b16 %v1494
      %v1544 = vunpack.c.l.b16 %v1495
      %v1545 = vunpack.c.l.b16 %v1496
      %v1546 = vpack.c.b16 %v1531, %v1530
      %v1547 = vpack.c.b16 %v1533, %v1532
      %v1548 = vpack.c.b16 %v1535, %v1534
      %v1549 = vpack.c.b16 %v1537, %v1536
      %v1550 = vpack.c.b16 %v1539, %v1538
      %v1551 = vpack.c.b16 %v1541, %v1540
      %v1552 = vpack.c.b16 %v1543, %v1542
      %v1553 = vpack.c.b16 %v1545, %v1544
      %v1566 = vunpack.c.l.b16 %v1497
      %v1567 = vunpack.c.l.b16 %v1498
      %v1568 = vunpack.c.l.b16 %v1499
      %v1569 = vunpack.c.l.b16 %v1500
      %v1570 = vunpack.c.l.b16 %v1501
      %v1571 = vunpack.c.l.b16 %v1502
      %v1572 = vunpack.c.l.b16 %v1503
      %v1573 = vunpack.c.l.b16 %v1504
      %v1574 = vunpack.c.l.b16 %v1505
      %v1575 = vunpack.c.l.b16 %v1506
      %v1576 = vunpack.c.l.b16 %v1507
      %v1577 = vunpack.c.l.b16 %v1508
      %v1578 = vpack.c.b16 %v1567, %v1566
      %v1579 = vpack.c.b16 %v1569, %v1568
      %v1580 = vpack.c.b16 %v1571, %v1570
      %v1581 = vpack.c.b16 %v1573, %v1572
      %v1582 = vpack.c.b16 %v1575, %v1574
      %v1583 = vpack.c.b16 %v1577, %v1576
      %vm1590 = vcmask 785408
      %v1592 = vsel %vm1590, %v1546, 0
      %v1595 = vsel %vm1590, %v1547, 0
      %v1598 = vsel %vm1590, %v1548, 0
      %v1601 = vsel %vm1590, %v1549, 0
      %v1604 = vsel %vm1590, %v1550, 0
      %v1607 = vsel %vm1590, %v1551, 0
      %v1610 = vsel %vm1590, %v1552, 0
      %v1613 = vsel %vm1590, %v1553, 0
      %1615 = vmatprep.subr.bf16.mxu0 0
      %1616 = vmatpush1.bf16.msra.mxu0 %v1578
      %1617 = vmatprep.subr.bf16.mxu0 0
      %1618 = vmatpush1.bf16.msra.mxu0 %v1579
      %1619 = vmatprep.subr.bf16.mxu0 0
      %1620 = vmatpush1.bf16.msra.mxu0 %v1580
      %1621 = vmatprep.subr.bf16.mxu0 0
      %1622 = vmatpush1.bf16.msra.mxu0 %v1581
      %1623 = vmatprep.subr.bf16.mxu0 0
      %1624 = vmatpush1.bf16.msra.mxu0 %v1582
      %1625 = vmatprep.subr.bf16.mxu0 0
      %1626 = vmatpush1.bf16.msra.mxu0 %v1583
      %1627 = vmatprep.subr.bf16.mxu0 0
      %1628 = vmatpush1.bf16.msra.mxu0 0
      %1629 = vmatprep.subr.bf16.mxu0 0
      %1630 = vmatpush1.bf16.msra.mxu0 0
      %1631 = vmatprep.subr.bf16.mxu0 0
      %1632 = vmatpush1.bf16.msra.mxu0 0
      %1633 = vmatprep.subr.bf16.mxu0 0
      %1634 = vmatpush1.bf16.msra.mxu0 0
      %1635 = vmatprep.subr.bf16.mxu0 0
      %1636 = vmatpush1.bf16.msra.mxu0 0
      %1637 = vmatprep.subr.bf16.mxu0 0
      %1638 = vmatpush1.bf16.msra.mxu0 0
      %1639 = vmatprep.subr.bf16.mxu0 0
      %1640 = vmatpush1.bf16.msra.mxu0 0
      %1641 = vmatprep.subr.bf16.mxu0 0
      %1642 = vmatpush1.bf16.msra.mxu0 0
      %1643 = vmatprep.subr.bf16.mxu0 0
      %1644 = vmatpush1.bf16.msra.mxu0 0
      %1645 = vmatprep.subr.bf16.mxu0 0
      %1646 = vmatpush1.bf16.msra.mxu0 0
      %1647 = vmatprep.mubr.bf16.mxu0 0
      %1648 = vmatmul.mubr.bf16.gmra.mrb[0].mxu0 %v1592
      %v1649 = vpop.f32.mrb[0].mxu0
      %v1650 = vadd.f32 %v1513, %v1649
      %v1651 = vpop.f32.mrb[0].mxu0
      %v1652 = vpop.f32.mrb[0].mxu0
      %v1653 = vadd.f32 %v1513, %v1652
      %v1654 = vpop.f32.mrb[0].mxu0
      %1655 = vmatprep.mubr.bf16.mxu0 0
      %1656 = vmatmul.mubr.bf16.gmra.mrb[0].mxu0 %v1595
      %v1657 = vpop.f32.mrb[0].mxu0
      %v1658 = vadd.f32 %v1513, %v1657
      %v1659 = vpop.f32.mrb[0].mxu0
      %v1660 = vpop.f32.mrb[0].mxu0
      %v1661 = vadd.f32 %v1513, %v1660
      %v1662 = vpop.f32.mrb[0].mxu0
      %1663 = vmatprep.mubr.bf16.mxu0 0
      %1664 = vmatmul.mubr.bf16.gmra.mrb[0].mxu0 %v1598
      %v1665 = vpop.f32.mrb[0].mxu0
      %v1666 = vadd.f32 %v1513, %v1665
      %v1667 = vpop.f32.mrb[0].mxu0
      %v1668 = vpop.f32.mrb[0].mxu0
      %v1669 = vadd.f32 %v1513, %v1668
      %v1670 = vpop.f32.mrb[0].mxu0
      %1671 = vmatprep.mubr.bf16.mxu0 0
      %1672 = vmatmul.mubr.bf16.gmra.mrb[0].mxu0 %v1601
      %v1673 = vpop.f32.mrb[0].mxu0
      %v1674 = vadd.f32 %v1513, %v1673
      %v1675 = vpop.f32.mrb[0].mxu0
      %v1676 = vpop.f32.mrb[0].mxu0
      %v1677 = vadd.f32 %v1513, %v1676
      %v1678 = vpop.f32.mrb[0].mxu0
      %1679 = vmatprep.mubr.bf16.mxu0 0
      %1680 = vmatmul.mubr.bf16.gmra.mrb[0].mxu0 %v1604
      %v1681 = vpop.f32.mrb[0].mxu0
      %v1682 = vadd.f32 %v1513, %v1681
      %v1683 = vpop.f32.mrb[0].mxu0
      %v1684 = vpop.f32.mrb[0].mxu0
      %v1685 = vadd.f32 %v1513, %v1684
      %v1686 = vpop.f32.mrb[0].mxu0
      %1687 = vmatprep.mubr.bf16.mxu0 0
      %1688 = vmatmul.mubr.bf16.gmra.mrb[0].mxu0 %v1607
      %v1689 = vpop.f32.mrb[0].mxu0
      %v1690 = vadd.f32 %v1513, %v1689
      %v1691 = vpop.f32.mrb[0].mxu0
      %v1692 = vpop.f32.mrb[0].mxu0
      %v1693 = vadd.f32 %v1513, %v1692
      %v1694 = vpop.f32.mrb[0].mxu0
      %1695 = vmatprep.mubr.bf16.mxu0 0
      %1696 = vmatmul.mubr.bf16.gmra.mrb[0].mxu0 %v1610
      %v1697 = vpop.f32.mrb[0].mxu0
      %v1698 = vadd.f32 %v1513, %v1697
      %v1699 = vpop.f32.mrb[0].mxu0
      %v1700 = vpop.f32.mrb[0].mxu0
      %v1701 = vadd.f32 %v1513, %v1700
      %v1702 = vpop.f32.mrb[0].mxu0
      %1703 = vmatprep.mubr.bf16.mxu0 0
      %1704 = vmatmul.mubr.bf16.gmra.mrb[0].mxu0 %v1613
      %v1705 = vpop.f32.mrb[0].mxu0
      %v1706 = vadd.f32 %v1513, %v1705
      %v1707 = vpop.f32.mrb[0].mxu0
      %v1708 = vpop.f32.mrb[0].mxu0
      %v1709 = vadd.f32 %v1513, %v1708
      %v1710 = vpop.f32.mrb[0].mxu0
      %1711 = vdwg.mxu0
      %v1712 = vmax.f32 %v1650, 0.0
      %v1713 = vmax.f32 %v1653, 0.0
      %v1714 = vmax.f32 %v1658, 0.0
      %v1715 = vmax.f32 %v1661, 0.0
      %v1716 = vmax.f32 %v1666, 0.0
      %v1717 = vmax.f32 %v1669, 0.0
      %v1718 = vmax.f32 %v1674, 0.0
      %v1719 = vmax.f32 %v1677, 0.0
      %v1720 = vmax.f32 %v1682, 0.0
      %v1721 = vmax.f32 %v1685, 0.0
      %v1722 = vmax.f32 %v1690, 0.0
      %v1723 = vmax.f32 %v1693, 0.0
      %v1724 = vmax.f32 %v1698, 0.0
      %v1725 = vmax.f32 %v1701, 0.0
      %v1726 = vmax.f32 %v1706, 0.0
      %v1727 = vmax.f32 %v1709, 0.0
      %1728 = vst.msk [vmem:[#allocation5] sm:$0xff] %vm869, %v1712
      %1729 = vst.msk [vmem:[#allocation5 + $0x8] sm:$0xff] %vm869, %v1713
      %1730 = vst.msk [vmem:[#allocation5 + $0x10] sm:$0xff] %vm869, %v1714
      %1731 = vst.msk [vmem:[#allocation5 + $0x18] sm:$0xff] %vm869, %v1715
      %1732 = vst.msk [vmem:[#allocation5 + $0x20] sm:$0xff] %vm869, %v1716
      %1733 = vst.msk [vmem:[#allocation5 + $0x28] sm:$0xff] %vm869, %v1717
      %1734 = vst.msk [vmem:[#allocation5 + $0x30] sm:$0xff] %vm869, %v1718
      %1735 = vst.msk [vmem:[#allocation5 + $0x38] sm:$0xff] %vm869, %v1719
      %1736 = vst.msk [vmem:[#allocation5 + $0x40] sm:$0xff] %vm869, %v1720
      %1737 = vst.msk [vmem:[#allocation5 + $0x48] sm:$0xff] %vm869, %v1721
      %1738 = vst.msk [vmem:[#allocation5 + $0x50] sm:$0xff] %vm869, %v1722
      %1739 = vst.msk [vmem:[#allocation5 + $0x58] sm:$0xff] %vm869, %v1723
      %1740 = vst.msk [vmem:[#allocation5 + $0x60] sm:$0xff] %vm869, %v1724
      %1741 = vst.msk [vmem:[#allocation5 + $0x68] sm:$0xff] %vm869, %v1725
      %1742 = vst.msk [vmem:[#allocation5 + $0x70] sm:$0xff] %vm869, %v1726
      %vm1743 = vcmask 254976
      %1744 = vst.msk [vmem:[#allocation5 + $0x78] sm:$0x3] %vm1743, %v1727
      %v1745 = vld [vmem:[#allocation5] ss:$4 sm:$0xff]
      %s1746 = scalar_lea.vmem [#allocation5], 32
      %v1747 = vld [vmem:[%s1746] ss:$4 sm:$0xff]
      %s1748 = scalar_lea.vmem [#allocation5], 64
      %v1749 = vld [vmem:[%s1748] ss:$4 sm:$0xff]
      %s1750 = scalar_lea.vmem [#allocation5], 96
      %v1751 = vld [vmem:[%s1750] ss:$4 sm:$0x3f]
      %s1752 = scalar_lea.vmem [#allocation5], 1
      %v1753 = vld [vmem:[%s1752] ss:$4 sm:$0xff]
      %s1754 = scalar_lea.vmem [#allocation5], 33
      %v1755 = vld [vmem:[%s1754] ss:$4 sm:$0xff]
      %s1756 = scalar_lea.vmem [#allocation5], 65
      %v1757 = vld [vmem:[%s1756] ss:$4 sm:$0xff]
      %s1758 = scalar_lea.vmem [#allocation5], 97
      %v1759 = vld [vmem:[%s1758] ss:$4 sm:$0x3f]
      %s1760 = scalar_lea.vmem [#allocation5], 2
      %v1761 = vld [vmem:[%s1760] ss:$4 sm:$0xff]
      %s1762 = scalar_lea.vmem [#allocation5], 34
      %v1763 = vld [vmem:[%s1762] ss:$4 sm:$0xff]
      %s1764 = scalar_lea.vmem [#allocation5], 66
      %v1765 = vld [vmem:[%s1764] ss:$4 sm:$0xff]
      %s1766 = scalar_lea.vmem [#allocation5], 98
      %v1767 = vld [vmem:[%s1766] ss:$4 sm:$0x3f]
      %s1768 = scalar_lea.vmem [#allocation5], 3
      %v1769 = vld [vmem:[%s1768] ss:$4 sm:$0xff]
      %s1770 = scalar_lea.vmem [#allocation5], 35
      %v1771 = vld [vmem:[%s1770] ss:$4 sm:$0xff]
      %s1772 = scalar_lea.vmem [#allocation5], 67
      %v1773 = vld [vmem:[%s1772] ss:$4 sm:$0xff]
      %s1774 = scalar_lea.vmem [#allocation5], 99
      %v1775 = vld [vmem:[%s1774] ss:$4 sm:$0x3f]
      %v1776 = vmax.f32 %v1745, %v1753
      %v1777 = vmax.f32 %v1747, %v1755
      %v1778 = vmax.f32 %v1749, %v1757
      %v1779 = vmax.f32 %v1751, %v1759
      %v1780 = vmax.f32 %v1761, %v1769
      %v1781 = vmax.f32 %v1763, %v1771
      %v1782 = vmax.f32 %v1765, %v1773
      %v1783 = vmax.f32 %v1767, %v1775
      %v1784 = vmax.f32 %v1776, %v1780
      %v1785 = vmax.f32 %v1777, %v1781
      %v1786 = vmax.f32 %v1778, %v1782
      %v1787 = vmax.f32 %v1779, %v1783
      %1788 = vst.msk [vmem:[#allocation6] sm:$0xff] %vm869, %v1784
      %1789 = vst.msk [vmem:[#allocation6 + $0x8] sm:$0xff] %vm869, %v1785
      %1790 = vst.msk [vmem:[#allocation6 + $0x10] sm:$0xff] %vm869, %v1786
      %vm1791 = vcmask 259072
      %1792 = vst.msk [vmem:[#allocation6 + $0x18] sm:$0x3f] %vm1791, %v1787
      %v1793 = vld [vmem:[#allocation6] sm:$0xff]
      %v1794 = vld [vmem:[#allocation6 + $0x8] sm:$0xff]
      %v1795 = vld [vmem:[#allocation6 + $0x10] sm:$0xff]
      %v1796 = vld [vmem:[#allocation6 + $0x18] sm:$0xf]
      %v1797 = vpack.c.bf16 %v1794, %v1793
      %v1798 = vpack.c.bf16 %v1796, %v1795
      %v1801 = vunpack.c.l.b16 %v1797
      %v1802 = vunpack.c.h.b16 %v1797
      %v1803 = vunpack.c.l.b16 %v1798
      %v1804 = vunpack.c.h.b16 %v1798
      %v1805 = vpack.c.b16 %v1801, %v1801
      %v1806 = vpack.c.b16 %v1802, %v1802
      %v1807 = vpack.c.b16 %v1803, %v1803
      %v1808 = vpack.c.b16 %v1804, %v1804
      %1813 = vst.msk [vmem:[#allocation7] sm:$0xf] %vm1122, %v1805
      %1814 = vst.msk [vmem:[#allocation7 + $0x4] sm:$0xf] %vm1122, %v1806
      %1815 = vst.msk [vmem:[#allocation7 + $0x8] sm:$0xf] %vm1122, %v1807
      %1816 = vst.msk [vmem:[#allocation7 + $0xc] sm:$0x3] %vm1743, %v1808
      %v1817 = vld [vmem:[#allocation6 + $0x1] sm:$0xff]
      %v1818 = vld [vmem:[#allocation6 + $0x9] sm:$0xff]
      %v1819 = vld [vmem:[#allocation6 + $0x11] sm:$0xff]
      %v1820 = vld [vmem:[#allocation6 + $0x19] sm:$0xf]
      %v1821 = vpack.c.bf16 %v1818, %v1817
      %v1822 = vpack.c.bf16 %v1820, %v1819
      %v1825 = vunpack.c.l.b16 %v1821
      %v1826 = vunpack.c.h.b16 %v1821
      %v1827 = vunpack.c.l.b16 %v1822
      %v1828 = vunpack.c.h.b16 %v1822
      %v1829 = vpack.c.b16 %v1825, %v1825
      %v1830 = vpack.c.b16 %v1826, %v1826
      %v1831 = vpack.c.b16 %v1827, %v1827
      %v1832 = vpack.c.b16 %v1828, %v1828
      %1833 = vrot.lane.b32.xlu0 %v1829, 32
      %v1834 = vpop.permute.xlu0 %1833
      %1835 = vrot.lane.b32.xlu0 %v1830, 32
      %v1836 = vpop.permute.xlu0 %1835
      %1837 = vrot.lane.b32.xlu0 %v1831, 32
      %v1838 = vpop.permute.xlu0 %1837
      %1839 = vrot.lane.b32.xlu0 %v1832, 32
      %v1840 = vpop.permute.xlu0 %1839
      %1845 = vst.msk [vmem:[#allocation7] sm:$0xf] %vm1333, %v1834
      %1846 = vst.msk [vmem:[#allocation7 + $0x4] sm:$0xf] %vm1333, %v1836
      %1847 = vst.msk [vmem:[#allocation7 + $0x8] sm:$0xf] %vm1333, %v1838
      %vm1848 = vcmask 517376
      %1849 = vst.msk [vmem:[#allocation7 + $0xc] sm:$0x3] %vm1848, %v1840
      %v1850 = vld [vmem:[#allocation6 + $0x2] sm:$0xff]
      %v1851 = vld [vmem:[#allocation6 + $0xa] sm:$0xff]
      %v1852 = vld [vmem:[#allocation6 + $0x12] sm:$0xff]
      %v1853 = vld [vmem:[#allocation6 + $0x1a] sm:$0xf]
      %v1854 = vpack.c.bf16 %v1851, %v1850
      %v1855 = vpack.c.bf16 %v1853, %v1852
      %v1858 = vunpack.c.l.b16 %v1854
      %v1859 = vunpack.c.h.b16 %v1854
      %v1860 = vunpack.c.l.b16 %v1855
      %v1861 = vunpack.c.h.b16 %v1855
      %v1862 = vpack.c.b16 %v1858, %v1858
      %v1863 = vpack.c.b16 %v1859, %v1859
      %v1864 = vpack.c.b16 %v1860, %v1860
      %v1865 = vpack.c.b16 %v1861, %v1861
      %1866 = vrot.lane.b32.xlu0 %v1862, 64
      %v1867 = vpop.permute.xlu0 %1866
      %1868 = vrot.lane.b32.xlu0 %v1863, 64
      %v1869 = vpop.permute.xlu0 %1868
      %1870 = vrot.lane.b32.xlu0 %v1864, 64
      %v1871 = vpop.permute.xlu0 %1870
      %1872 = vrot.lane.b32.xlu0 %v1865, 64
      %v1873 = vpop.permute.xlu0 %1872
      %1878 = vst.msk [vmem:[#allocation7] sm:$0xf] %vm1463, %v1867
      %1879 = vst.msk [vmem:[#allocation7 + $0x4] sm:$0xf] %vm1463, %v1869
      %1880 = vst.msk [vmem:[#allocation7 + $0x8] sm:$0xf] %vm1463, %v1871
      %vm1881 = vcmask 779776
      %1882 = vst.msk [vmem:[#allocation7 + $0xc] sm:$0x3] %vm1881, %v1873
      %v1883 = vld [vmem:[#allocation7] sm:$0xf]
      %v1884 = vld [vmem:[#allocation7 + $0x4] sm:$0xf]
      %v1885 = vld [vmem:[#allocation7 + $0x8] sm:$0xf]
      %v1886 = vld [vmem:[#allocation7 + $0xc] sm:$0x3]
      %v1887 = vld [vmem:[%s1 + $0x58] sm:$0xf]
      %v1888 = vld [vmem:[%s1 + $0x5c] sm:$0xf]
      %v1889 = vld [vmem:[%s1 + $0x60] sm:$0xf]
      %v1890 = vld [vmem:[%s1 + $0x64] sm:$0xf]
      %v1891 = vld [vmem:[%s1 + $0x68] sm:$0xf]
      %v1892 = vld [vmem:[%s1 + $0x6c] sm:$0xf]
      %v1893 = vld [vmem:[%s1 + $0x70] sm:$0xf]
      %v1894 = vld [vmem:[%s1 + $0x74] sm:$0xf]
      %v1895 = vld [vmem:[%s1 + $0x78] sm:$0xf]
      %v1896 = vld [vmem:[%s1 + $0x7c] sm:$0xf]
      %v1897 = vld [vmem:[%s1 + $0x80] sm:$0xf]
      %v1898 = vld [vmem:[%s1 + $0x84] sm:$0xf]
      %v1899 = vld [vmem:[%s2 + $0x2] sm:$0x1]
      %v1900 = vlaneseq
      %v1901 = vshrl.u32 %v1900, 7
      %v1902 = vsub.s32 0, %v1901
      %v1903 = vrot.slane %v1899, %v1902
      %v1908 = vunpack.c.l.b16 %v1883
      %v1909 = vunpack.c.l.b16 %v1884
      %v1910 = vunpack.c.l.b16 %v1885
      %v1911 = vunpack.c.l.b16 %v1886
      %v1912 = vpack.c.b16 %v1909, %v1908
      %v1913 = vpack.c.b16 %v1911, %v1910
      %v1926 = vunpack.c.l.b16 %v1887
      %v1927 = vunpack.c.l.b16 %v1888
      %v1928 = vunpack.c.l.b16 %v1889
      %v1929 = vunpack.c.l.b16 %v1890
      %v1930 = vunpack.c.l.b16 %v1891
      %v1931 = vunpack.c.l.b16 %v1892
      %v1932 = vunpack.c.l.b16 %v1893
      %v1933 = vunpack.c.l.b16 %v1894
      %v1934 = vunpack.c.l.b16 %v1895
      %v1935 = vunpack.c.l.b16 %v1896
      %v1936 = vunpack.c.l.b16 %v1897
      %v1937 = vunpack.c.l.b16 %v1898
      %v1938 = vpack.c.b16 %v1927, %v1926
      %v1939 = vpack.c.b16 %v1929, %v1928
      %v1940 = vpack.c.b16 %v1931, %v1930
      %v1941 = vpack.c.b16 %v1933, %v1932
      %v1942 = vpack.c.b16 %v1935, %v1934
      %v1943 = vpack.c.b16 %v1937, %v1936
      %v1951 = vsel %vm1590, %v1912, 0
      %v1954 = vsel %vm1590, %v1913, 0
      %1956 = vmatprep.subr.bf16.mxu0 0
      %1957 = vmatpush1.bf16.msra.mxu0 %v1938
      %1958 = vmatprep.subr.bf16.mxu0 0
      %1959 = vmatpush1.bf16.msra.mxu0 %v1939
      %1960 = vmatprep.subr.bf16.mxu0 0
      %1961 = vmatpush1.bf16.msra.mxu0 %v1940
      %1962 = vmatprep.subr.bf16.mxu0 0
      %1963 = vmatpush1.bf16.msra.mxu0 %v1941
      %1964 = vmatprep.subr.bf16.mxu0 0
      %1965 = vmatpush1.bf16.msra.mxu0 %v1942
      %1966 = vmatprep.subr.bf16.mxu0 0
      %1967 = vmatpush1.bf16.msra.mxu0 %v1943
      %1968 = vmatprep.subr.bf16.mxu0 0
      %1969 = vmatpush1.bf16.msra.mxu0 0
      %1970 = vmatprep.subr.bf16.mxu0 0
      %1971 = vmatpush1.bf16.msra.mxu0 0
      %1972 = vmatprep.subr.bf16.mxu0 0
      %1973 = vmatpush1.bf16.msra.mxu0 0
      %1974 = vmatprep.subr.bf16.mxu0 0
      %1975 = vmatpush1.bf16.msra.mxu0 0
      %1976 = vmatprep.subr.bf16.mxu0 0
      %1977 = vmatpush1.bf16.msra.mxu0 0
      %1978 = vmatprep.subr.bf16.mxu0 0
      %1979 = vmatpush1.bf16.msra.mxu0 0
      %1980 = vmatprep.subr.bf16.mxu0 0
      %1981 = vmatpush1.bf16.msra.mxu0 0
      %1982 = vmatprep.subr.bf16.mxu0 0
      %1983 = vmatpush1.bf16.msra.mxu0 0
      %1984 = vmatprep.subr.bf16.mxu0 0
      %1985 = vmatpush1.bf16.msra.mxu0 0
      %1986 = vmatprep.subr.bf16.mxu0 0
      %1987 = vmatpush1.bf16.msra.mxu0 0
      %1988 = vmatprep.mubr.bf16.mxu0 0
      %1989 = vmatmul.mubr.bf16.gmra.mrb[0].mxu0 %v1951
      %v1990 = vpop.f32.mrb[0].mxu0
      %v1991 = vadd.f32 %v1903, %v1990
      %v1992 = vpop.f32.mrb[0].mxu0
      %v1993 = vpop.f32.mrb[0].mxu0
      %v1994 = vadd.f32 %v1903, %v1993
      %v1995 = vpop.f32.mrb[0].mxu0
      %1996 = vmatprep.mubr.bf16.mxu0 0
      %1997 = vmatmul.mubr.bf16.gmra.mrb[0].mxu0 %v1954
      %v1998 = vpop.f32.mrb[0].mxu0
      %v1999 = vadd.f32 %v1903, %v1998
      %v2000 = vpop.f32.mrb[0].mxu0
      %v2001 = vpop.f32.mrb[0].mxu0
      %v2002 = vadd.f32 %v1903, %v2001
      %v2003 = vpop.f32.mrb[0].mxu0
      %2004 = vdwg.mxu0
      %v2005 = vmax.f32 %v1991, 0.0
      %v2006 = vmax.f32 %v1994, 0.0
      %v2007 = vmax.f32 %v1999, 0.0
      %v2008 = vmax.f32 %v2002, 0.0
      %vm2009 = vcmask 523264
      %2010 = vst.msk [vmem:[#allocation8] sm:$0xff] %vm2009, %v2005
      %2011 = vst.msk [vmem:[#allocation8 + $0x8] sm:$0xff] %vm2009, %v2006
      %2012 = vst.msk [vmem:[#allocation8 + $0x10] sm:$0xff] %vm2009, %v2007
      %vm2013 = vcmask 519168
      %2014 = vst.msk [vmem:[#allocation8 + $0x18] sm:$0xf] %vm2013, %v2008
      %v2015 = vld [vmem:[#allocation8] ss:$4 sm:$0x7f]
      %s2016 = scalar_lea.vmem [#allocation8], 1
      %v2017 = vld [vmem:[%s2016] ss:$4 sm:$0x7f]
      %s2018 = scalar_lea.vmem [#allocation8], 2
      %v2019 = vld [vmem:[%s2018] ss:$4 sm:$0x7f]
      %s2020 = scalar_lea.vmem [#allocation8], 3
      %v2021 = vld [vmem:[%s2020] ss:$4 sm:$0x7f]
      %v2022 = vmax.f32 %v2015, %v2017
      %v2023 = vmax.f32 %v2019, %v2021
      %v2024 = vmax.f32 %v2022, %v2023
      %vm2025 = vcmask 522240
      %2026 = vst.msk [vmem:[#allocation9] sm:$0x7f] %vm2025, %v2024
      %v2027 = vld [vmem:[#allocation9] sm:$0x1f]
      %v2028 = vpack.c.bf16 %v2027, %v2027
      %vm2029 = vcmask 518144
      %vm2030 = vsmask.f32 2304
      %vm2031 = vmand %vm2029, %vm2030
      %v2032 = vld [vmem:[#allocation10] sm:$0x7]
      %v2033 = vsel %vm2031, %v2028, %v2032
      %2034 = vst [vmem:[#allocation10] sm:$0x7] %v2033
      %v2035 = vld [vmem:[#allocation9 + $0x1] sm:$0x1f]
      %v2036 = vpack.c.bf16 %v2035, %v2035
      %v2038 = vunpack.c.l.b16 %v2036
      %v2039 = vpack.c.b16 %v2038, %v2038
      %2040 = vrot.lane.b32.xlu0 %v2039, 64
      %v2041 = vpop.permute.xlu0 %2040
      %vm2043 = vcmask 1042944
      %vm2044 = vmand %vm2043, %vm2030
      %v2045 = vld [vmem:[#allocation10] sm:$0x7]
      %v2046 = vsel %vm2044, %v2041, %v2045
      %2047 = vst [vmem:[#allocation10] sm:$0x7] %v2046
      %v2048 = vld [vmem:[#allocation9 + $0x2] sm:$0x1f]
      %v2049 = vpack.c.bf16 %v2048, %v2048
      %v2050 = vld [vmem:[#allocation10 + $0x4] sm:$0x7]
      %v2051 = vsel %vm2031, %v2049, %v2050
      %2052 = vst [vmem:[#allocation10 + $0x4] sm:$0x7] %v2051
      %v2053 = vld [vmem:[#allocation10] sm:$0x77]
      %v2054 = vld [vmem:[%s1 + $0x88] sm:$0xf]
      %v2055 = vld [vmem:[%s1 + $0x8c] sm:$0xf]
      %v2056 = vld [vmem:[%s1 + $0x90] sm:$0xf]
      %v2057 = vld [vmem:[%s1 + $0x94] sm:$0xf]
      %v2058 = vld [vmem:[%s1 + $0x98] sm:$0xf]
      %v2059 = vld [vmem:[%s1 + $0x9c] sm:$0xf]
      %v2060 = vld [vmem:[%s1 + $0xa0] sm:$0xf]
      %v2061 = vld [vmem:[%s1 + $0xa4] sm:$0xf]
      %v2062 = vld [vmem:[%s1 + $0xa8] sm:$0xf]
      %v2063 = vld [vmem:[%s1 + $0xac] sm:$0xf]
      %v2064 = vld [vmem:[%s1 + $0xb0] sm:$0xf]
      %v2065 = vld [vmem:[%s1 + $0xb4] sm:$0xf]
      %v2066 = vld [vmem:[%s1 + $0xb8] sm:$0xf]
      %v2067 = vld [vmem:[%s1 + $0xbc] sm:$0xf]
      %v2068 = vld [vmem:[%s1 + $0xc0] sm:$0xf]
      %v2069 = vld [vmem:[%s1 + $0xc4] sm:$0xf]
      %v2070 = vld [vmem:[%s1 + $0xc8] sm:$0xf]
      %v2071 = vld [vmem:[%s1 + $0xcc] sm:$0xf]
      %v2072 = vld [vmem:[%s1 + $0xd0] sm:$0xf]
      %v2073 = vld [vmem:[%s1 + $0xd4] sm:$0xf]
      %v2074 = vld [vmem:[%s1 + $0xd8] sm:$0xf]
      %v2075 = vld [vmem:[%s1 + $0xdc] sm:$0xf]
      %v2076 = vld [vmem:[%s1 + $0xe0] sm:$0xf]
      %v2077 = vld [vmem:[%s1 + $0xe4] sm:$0xf]
      %v2078 = vld [vmem:[%s2 + $0x3] sm:$0x1]
      %v2079 = vlaneseq
      %v2080 = vshrl.u32 %v2079, 7
      %v2081 = vsub.s32 0, %v2080
      %v2082 = vrot.slane %v2078, %v2081
      %v2084 = vunpack.c.l.b16 %v2053
      %v2085 = vunpack.c.h.b16 %v2053
      %v2086 = vpack.c.b16 %v2084, %v2084
      %v2087 = vpack.c.b16 %v2085, %v2085
      %v2113 = vunpack.c.l.b16 %v2054
      %v2114 = vunpack.c.l.b16 %v2055
      %v2115 = vunpack.c.l.b16 %v2056
      %v2116 = vunpack.c.l.b16 %v2057
      %v2117 = vunpack.c.l.b16 %v2058
      %v2118 = vunpack.c.l.b16 %v2059
      %v2119 = vunpack.c.l.b16 %v2060
      %v2120 = vunpack.c.l.b16 %v2061
      %v2121 = vunpack.c.l.b16 %v2062
      %v2122 = vunpack.c.l.b16 %v2063
      %v2123 = vunpack.c.l.b16 %v2064
      %v2124 = vunpack.c.l.b16 %v2065
      %v2125 = vunpack.c.l.b16 %v2066
      %v2126 = vunpack.c.l.b16 %v2067
      %v2127 = vunpack.c.l.b16 %v2068
      %v2128 = vunpack.c.l.b16 %v2069
      %v2129 = vunpack.c.l.b16 %v2070
      %v2130 = vunpack.c.l.b16 %v2071
      %v2131 = vunpack.c.l.b16 %v2072
      %v2132 = vunpack.c.l.b16 %v2073
      %v2133 = vunpack.c.l.b16 %v2074
      %v2134 = vunpack.c.l.b16 %v2075
      %v2135 = vunpack.c.l.b16 %v2076
      %v2136 = vunpack.c.l.b16 %v2077
      %v2137 = vpack.c.b16 %v2114, %v2113
      %v2138 = vpack.c.b16 %v2116, %v2115
      %v2139 = vpack.c.b16 %v2118, %v2117
      %v2140 = vpack.c.b16 %v2120, %v2119
      %v2141 = vpack.c.b16 %v2122, %v2121
      %v2142 = vpack.c.b16 %v2124, %v2123
      %v2143 = vpack.c.b16 %v2126, %v2125
      %v2144 = vpack.c.b16 %v2128, %v2127
      %v2145 = vpack.c.b16 %v2130, %v2129
      %v2146 = vpack.c.b16 %v2132, %v2131
      %v2147 = vpack.c.b16 %v2134, %v2133
      %v2148 = vpack.c.b16 %v2136, %v2135
      %v2162 = vsel %vm2009, %v2087, 0
      %2164 = vmatprep.subr.bf16.mxu0 0
      %2165 = vmatpush1.bf16.msra.mxu0 %v2137
      %2166 = vmatprep.subr.bf16.mxu0 0
      %2167 = vmatpush1.bf16.msra.mxu0 %v2138
      %2168 = vmatprep.subr.bf16.mxu0 0
      %2169 = vmatpush1.bf16.msra.mxu0 %v2139
      %2170 = vmatprep.subr.bf16.mxu0 0
      %2171 = vmatpush1.bf16.msra.mxu0 %v2140
      %2172 = vmatprep.subr.bf16.mxu0 0
      %2173 = vmatpush1.bf16.msra.mxu0 %v2141
      %2174 = vmatprep.subr.bf16.mxu0 0
      %2175 = vmatpush1.bf16.msra.mxu0 %v2142
      %2176 = vmatprep.subr.bf16.mxu0 0
      %2177 = vmatpush1.bf16.msra.mxu0 %v2143
      %2178 = vmatprep.subr.bf16.mxu0 0
      %2179 = vmatpush1.bf16.msra.mxu0 %v2144
      %2180 = vmatprep.subr.bf16.mxu0 0
      %2181 = vmatpush1.bf16.msra.mxu0 %v2145
      %2182 = vmatprep.subr.bf16.mxu0 0
      %2183 = vmatpush1.bf16.msra.mxu0 %v2146
      %2184 = vmatprep.subr.bf16.mxu0 0
      %2185 = vmatpush1.bf16.msra.mxu0 %v2147
      %2186 = vmatprep.subr.bf16.mxu0 0
      %2187 = vmatpush1.bf16.msra.mxu0 %v2148
      %2188 = vmatprep.subr.bf16.mxu0 0
      %2189 = vmatpush1.bf16.msra.mxu0 0
      %2190 = vmatprep.subr.bf16.mxu0 0
      %2191 = vmatpush1.bf16.msra.mxu0 0
      %2192 = vmatprep.subr.bf16.mxu0 0
      %2193 = vmatpush1.bf16.msra.mxu0 0
      %2194 = vmatprep.subr.bf16.mxu0 0
      %2195 = vmatpush1.bf16.msra.mxu0 0
      %2196 = vmatprep.mubr.bf16.mxu0 %v2162
      %2197 = vmatmul.mubr.bf16.gmra.mrb[0].mxu0 %v2086
      %v2198 = vpop.f32.mrb[0].mxu0
      %v2199 = vadd.f32 %v2082, %v2198
      %v2200 = vpop.f32.mrb[0].mxu0
      %v2201 = vpop.f32.mrb[0].mxu0
      %v2202 = vpop.f32.mrb[0].mxu0
      %2203 = vdwg.mxu0
      %v2204 = vmax.f32 %v2199, 0.0
      %vm2205 = vcmask 520192
      %2206 = vst.msk [vmem:[#allocation11] sm:$0x1f] %vm2205, %v2204
      %v2207 = vld [vmem:[#allocation11] sm:$0xf]
      %v2208 = vsel %vm2013, %v2207, -inf
      %v2209 = vrot.slane %v2208, 4
      %v2210 = vmax.f32 %v2208, %v2209
      %v2211 = vrot.slane %v2210, 2
      %v2212 = vmax.f32 %v2210, %v2211
      %v2213 = vrot.slane %v2212, 1
      %v2214 = vmax.f32 %v2212, %v2213
      %v2215 = vadd.f32 %v2214, 0.0
      %v2216 = vpack.c.bf16 %v2215, %v2215
      %v2217 = vld [vmem:[%s1 + $0xe8] sm:$0xf]
      %v2218 = vld [vmem:[%s1 + $0xec] sm:$0xf]
      %v2219 = vld [vmem:[%s1 + $0xf0] sm:$0xf]
      %v2220 = vld [vmem:[%s1 + $0xf4] sm:$0xf]
      %v2221 = vld [vmem:[%s1 + $0xf8] sm:$0xf]
      %v2222 = vld [vmem:[%s1 + $0xfc] sm:$0xf]
      %v2223 = vld [vmem:[%s1 + $0x100] sm:$0xf]
      %v2224 = vld [vmem:[%s1 + $0x104] sm:$0xf]
      %v2225 = vld [vmem:[%s2 + $0x4] sm:$0x1]
      %v2234 = vunpack.c.l.b16 %v2217
      %v2235 = vunpack.c.l.b16 %v2218
      %v2236 = vunpack.c.l.b16 %v2219
      %v2237 = vunpack.c.l.b16 %v2220
      %v2238 = vunpack.c.l.b16 %v2221
      %v2239 = vunpack.c.l.b16 %v2222
      %v2240 = vunpack.c.l.b16 %v2223
      %v2241 = vunpack.c.l.b16 %v2224
      %v2242 = vpack.c.b16 %v2235, %v2234
      %v2243 = vpack.c.b16 %v2237, %v2236
      %v2244 = vpack.c.b16 %v2239, %v2238
      %v2245 = vpack.c.b16 %v2241, %v2240
      %v2251 = vsel %vm2009, %v2216, 0
      %2253 = vmatprep.subr.bf16.mxu0 0
      %2254 = vmatpush1.bf16.msra.mxu0 %v2242
      %2255 = vmatprep.subr.bf16.mxu0 0
      %2256 = vmatpush1.bf16.msra.mxu0 %v2243
      %2257 = vmatprep.subr.bf16.mxu0 0
      %2258 = vmatpush1.bf16.msra.mxu0 %v2244
      %2259 = vmatprep.subr.bf16.mxu0 0
      %2260 = vmatpush1.bf16.msra.mxu0 %v2245
      %2261 = vmatprep.subr.bf16.mxu0 0
      %2262 = vmatpush1.bf16.msra.mxu0 0
      %2263 = vmatprep.subr.bf16.mxu0 0
      %2264 = vmatpush1.bf16.msra.mxu0 0
      %2265 = vmatprep.subr.bf16.mxu0 0
      %2266 = vmatpush1.bf16.msra.mxu0 0
      %2267 = vmatprep.subr.bf16.mxu0 0
      %2268 = vmatpush1.bf16.msra.mxu0 0
      %2269 = vmatprep.subr.bf16.mxu0 0
      %2270 = vmatpush1.bf16.msra.mxu0 0
      %2271 = vmatprep.subr.bf16.mxu0 0
      %2272 = vmatpush1.bf16.msra.mxu0 0
      %2273 = vmatprep.subr.bf16.mxu0 0
      %2274 = vmatpush1.bf16.msra.mxu0 0
      %2275 = vmatprep.subr.bf16.mxu0 0
      %2276 = vmatpush1.bf16.msra.mxu0 0
      %2277 = vmatprep.subr.bf16.mxu0 0
      %2278 = vmatpush1.bf16.msra.mxu0 0
      %2279 = vmatprep.subr.bf16.mxu0 0
      %2280 = vmatpush1.bf16.msra.mxu0 0
      %2281 = vmatprep.subr.bf16.mxu0 0
      %2282 = vmatpush1.bf16.msra.mxu0 0
      %2283 = vmatprep.subr.bf16.mxu0 0
      %2284 = vmatpush1.bf16.msra.mxu0 0
      %2285 = vmatprep.mubr.bf16.mxu0 0
      %2286 = vmatmul.mubr.bf16.gmra.mrb[0].mxu0 %v2251
      %v2287 = vpop.f32.mrb[0].mxu0
      %v2288 = vadd.f32 %v2225, %v2287
      %v2289 = vpop.f32.mrb[0].mxu0
      %v2290 = vpop.f32.mrb[0].mxu0
      %v2291 = vpop.f32.mrb[0].mxu0
      %2292 = vdwg.mxu0
      %vm2293 = vcmask 1040384
      %v2294 = vsel %vm2293, %v2288, -inf
      %2295 = vmax.xlane.f32.xlu0 %v2294
      %v2296 = vpop.xlane.xlu0 %2295
      %v2297 = vsub.f32 %v2288, %v2296
      %v2298 = vmul.f32 %v2297, 1.442695
      %v2299 = vpow.pop %v2298
      %v2300 = vsel %vm2293, %v2299, 0.0
      %2301 = vadd.xlane.f32.xlu0 %v2300
      %v2302 = vpop.xlane.xlu0 %2301
      %v2303 = vlog2.pop %v2302
      %v2304 = vmul.f32 %v2303, 0.6931472
      %v2305 = vsub.f32 %v2297, %v2304
      %v2306 = vlaneseq
      %v2307 = vshrl.u32 %v2306, 7
      %v2308 = vsub.s32 0, %v2307
      %v2309 = vrot.slane %v2305, %v2308
      %2310 = vst [vmem:[%s168] sm:$0xff] %v2309
      %p2311 = scmp.lt.s32.totalorder %s14, 1
      %s2312 = scalar_select %p2311, %s14, 1
      %s2313 = smul.addr %s2312, 8
      %s2314 = scalar_lea.vmem %s3, %s2313
      // Predicated region
      $region33: #{m5_forward.1} parent=31 // pred_check
        %p2315 = pneg %p100
      $region34: #{m5_forward.1} parent=31 // pred_check_branch
        %2317 = sbr.rel (%p2315) target = $region36
      $region35: #{m5_forward.1} parent=31 // pred_region
        _
      $region36: #{m5_forward.1} parent=31 // pred_fallthru
        _
    $region32: #{m5_forward.1} parent=5 // pred_fallthru
      _
    %p2318 = scmp.le.s32.totalorder 2, %s9
    // Predicated region
    $region37: #{m5_forward.1} parent=5 // pred_check
      %p2319 = pneg %p2318
    $region38: #{m5_forward.1} parent=5 // pred_check_branch
      %2321 = sbr.rel (%p2319) target = $region40
    $region39: #{m5_forward.1} parent=5 // pred_region
      %s2322 = ssub.s32 %s9, 2
      // Predicated region
      $region41: #{m5_forward.1} parent=39 // pred_check
        %p2323 = pneg %p106
      $region42: #{m5_forward.1} parent=39 // pred_check_branch
        %2325 = sbr.rel (%p2323) target = $region44
      $region43: #{m5_forward.1} parent=39 // pred_region
        %p2326 = scmp.lt.s32.totalorder %s15, 1
        %s2327 = scalar_select %p2326, %s15, 1
        %s2328 = smul.addr %s2327, 8
        %s2329 = scalar_lea.vmem %s3, %s2328
      $region44: #{m5_forward.1} parent=39 // pred_fallthru
        _
    $region40: #{m5_forward.1} parent=5 // pred_fallthru
      _
  $region6: #{m5_forward.1} parent=0 // loop_footer
    %s13 = sadd.s32 1, %s9
  $region7: #{m5_forward.1} parent=0 // loop_footer_branch
    %8 = sbr.rel target = $region3
  $region8: #{m5_forward.1} parent=0 // loop_exit
    _

</llo_original>
